<compile_context>
chip_gen: v7x
topology: tpu7x:2x2x1
jax: 0.10.0
libtpu: 0.0.40
codegen_flags: <defaults>
</compile_context>

<pallas_src>
import functools

import jax
import jax.numpy as jnp
from jax.experimental import pallas as pl
from jax.experimental.pallas import tpu as pltpu


def gat_kernel(x_ref, bias_ref, w_ref, a_ref, o_ref, *, alpha):
    # x_ref   : (1, N, F_in, T)   all timesteps of one batch element (native layout)
    # bias_ref: (N, N)            additive adjacency mask (0 where edge, -9e15 elsewhere)
    # w_ref   : (F_in, F_out)     bf16
    # a_ref   : (F_out, 2)        f32, columns = [a1 | a2]
    # o_ref   : (1, N, F_out, T)  module output layout
    _, N, F_in, T = x_ref.shape
    F_out = w_ref.shape[1]

    x = x_ref[0]                                                  # (N, F_in, T) f32

    # Reorganize to time-major so every timestep shares one big-M matmul.
    # Decomposed into a minor-2 swap + a leading<->sublane swap (standard relayouts).
    xt = jnp.swapaxes(x, 1, 2)                                    # (N, T, F_in)
    xt = jnp.swapaxes(xt, 0, 1)                                   # (T, N, F_in)
    x2 = xt.reshape(T * N, F_in)                                  # (T*N, F_in)

    # Wh for all T timesteps in a single MXU matmul (bf16 in, f32 accumulate).
    Wh2 = jnp.dot(x2.astype(jnp.bfloat16), w_ref[...],
                  preferred_element_type=jnp.float32)             # (T*N, F_out)

    # Fused attention scoring: [Wh@a1 | Wh@a2] in one small f32 matmul
    # (kept f32: errors here get amplified by exp in the softmax).
    wh12 = jnp.dot(Wh2, a_ref[...],
                   preferred_element_type=jnp.float32)            # (T*N, 2)

    Wh = Wh2.reshape(T, N, F_out)                                 # (T, N, F_out)
    wh12 = wh12.reshape(T, N, 2)
    wh_src = wh12[:, :, 0:1]                                      # (T, N, 1)
    wh_dst = jnp.swapaxes(wh12[:, :, 1:2], 1, 2)                  # (T, 1, N)

    e = wh_src + wh_dst                                           # (T, N, N)
    e = jnp.where(e > 0, e, alpha * e)                            # LeakyReLU(alpha)
    e = e + bias_ref[...]                                         # adjacency mask (additive)

    # Row softmax (over neighbors j = last axis), divide via approximate reciprocal (EUP).
    e = e - jnp.max(e, axis=-1, keepdims=True)
    p = jnp.exp(e)
    denom = jnp.sum(p, axis=-1, keepdims=True)
    att = p * pl.reciprocal(denom, approx=True)                   # (T, N, N)

    # dropout(training=False) == identity.
    hp = jnp.einsum('tnm,tmo->tno',
                    att.astype(jnp.bfloat16), Wh.astype(jnp.bfloat16),
                    preferred_element_type=jnp.float32)           # (T, N, F_out)

    # concat=True -> ELU (clamp the exp argument so the discarded lane stays finite).
    out = jnp.where(hp > 0, hp, jnp.exp(jnp.minimum(hp, 0.0)) - 1.0)

    # Back to the module's (N, F_out, T) layout and store the whole batch slab at once.
    out = jnp.swapaxes(out, 0, 1)                                 # (N, T, F_out)
    out = jnp.swapaxes(out, 1, 2)                                 # (N, F_out, T)
    o_ref[0] = out.astype(o_ref.dtype)


def gat_forward(x, adj, W, a, alpha=0.2):
    """x: (B, N, F_in, T); adj: (N, N); W: (F_in, F_out); a: (2*F_out, 1)."""
    B, N, F_in, T = x.shape
    F_out = W.shape[1]

    # Additive adjacency bias computed once (replaces per-step compare + select).
    adj_bias = jnp.where(adj > 0, jnp.float32(0.0), jnp.float32(-9.0e15))
    # Fused attention vectors: columns [a1 | a2], shape (F_out, 2).
    a_cols = a.reshape(2, F_out).T.astype(jnp.float32)
    w_bf16 = W.astype(jnp.bfloat16)

    return pl.pallas_call(
        functools.partial(gat_kernel, alpha=alpha),
        out_shape=jax.ShapeDtypeStruct((B, N, F_out, T), jnp.float32),
        grid_spec=pltpu.PrefetchScalarGridSpec(
            num_scalar_prefetch=0,
            grid=(B,),
            in_specs=[
                pl.BlockSpec((1, N, F_in, T), lambda b: (b, 0, 0, 0)),
                pl.BlockSpec((N, N), lambda b: (0, 0)),
                pl.BlockSpec((F_in, F_out), lambda b: (0, 0)),
                pl.BlockSpec((F_out, 2), lambda b: (0, 0)),
            ],
            out_specs=pl.BlockSpec((1, N, F_out, T), lambda b: (b, 0, 0, 0)),
        ),
        compiler_params=pltpu.CompilerParams(
            dimension_semantics=("parallel",)),
    )(x.astype(jnp.float32), adj_bias, w_bf16, a_cols)


def _xavier_uniform(key, shape, gain):
    fan_in, fan_out = shape[0], shape[1]
    bound = gain * jnp.sqrt(6.0 / (fan_in + fan_out))
    return jax.random.uniform(key, shape, jnp.float32, -bound, bound)


def _reference(x, adj, W, a, alpha=0.2):
    """Pure-JAX f32 reference of the PyTorch forward (eval mode, concat=True)."""
    F_out = W.shape[1]
    Wh = jnp.einsum('bnft,fo->bnot', x, W)                      # (B, N, F_out, T)
    wh1 = jnp.einsum('bnot,o->bnt', Wh, a[:F_out, 0])           # (B, N, T)
    wh2 = jnp.einsum('bnot,o->bnt', Wh, a[F_out:, 0])           # (B, N, T)
    e = wh1[:, :, None, :] + wh2[:, None, :, :]                 # (B, N, N, T)
    e = jnp.where(e > 0, e, alpha * e)
    att = jnp.where(adj[None, :, :, None] > 0, e, -9.0e15)
    att = jax.nn.softmax(att, axis=2)
    h_prime = jnp.einsum('bnmt,bmot->bnot', att, Wh)            # (B, N, F_out, T)
    return jnp.where(h_prime > 0, h_prime, jnp.exp(h_prime) - 1.0)


if __name__ == "__main__":
    B, N, F_IN, F_OUT, T = 2, 16, 4, 8, 4
    alpha = 0.2

    key = jax.random.PRNGKey(0)
    kx, kadj, kw, ka = jax.random.split(key, 4)

    x = jax.random.normal(kx, (B, N, F_IN, T), jnp.float32)
    # random binary adjacency with self-loops
    adj = (jax.random.uniform(kadj, (N, N)) > 0.5).astype(jnp.float32)
    adj = jnp.maximum(adj, jnp.eye(N, dtype=jnp.float32))

    W = _xavier_uniform(kw, (F_IN, F_OUT), gain=1.414)
    a = _xavier_uniform(ka, (2 * F_OUT, 1), gain=1.414)

    out = gat_forward(x, adj, W, a, alpha=alpha)
    out = jax.block_until_ready(out)

    ref = _reference(x, adj, W, a, alpha=alpha)
    assert out.shape == (B, N, F_OUT, T), out.shape
    # bf16 MXU operands + approximate reciprocal -> compare to the f32 reference
    # with a tolerance that comfortably covers bf16 rounding.
    assert jnp.allclose(out, ref, atol=5e-2, rtol=5e-2), "mismatch vs reference"

    print("KERNEL_OK")
</pallas_src>

<mosaic_0001>
module attributes {stable_mosaic.version = 11 : i64} {
  func.func @gat_kernel(%arg0: i32, %arg1: memref<1x16x4x4xf32, #tpu.memory_space<vmem>>, %arg2: memref<16x16xf32, #tpu.memory_space<vmem>>, %arg3: memref<4x8xbf16, #tpu.memory_space<vmem>>, %arg4: memref<8x2xf32, #tpu.memory_space<vmem>>, %arg5: memref<1x16x8x4xf32, #tpu.memory_space<vmem>>) attributes {dimension_semantics = [#tpu.dimension_semantics<parallel>], iteration_bounds = array<i64: 2>, scalar_prefetch = 0 : i64, scratch_operands = 0 : i64, tpu.core_type = #tpu.core_type<tc>, window_params = [{transform_indices = @transform_0, window_bounds = array<i64: 1, 16, 4, 4>}, {pipeline_mode = #tpu.pipeline_mode<synchronous>, transform_indices = @transform_1, window_bounds = array<i64: 16, 16>}, {pipeline_mode = #tpu.pipeline_mode<synchronous>, transform_indices = @transform_2, window_bounds = array<i64: 4, 8>}, {pipeline_mode = #tpu.pipeline_mode<synchronous>, transform_indices = @transform_3, window_bounds = array<i64: 8, 2>}, {transform_indices = @transform_4, window_bounds = array<i64: 1, 16, 8, 4>}]} {
    %c0 = arith.constant 0 : index
    %c0_0 = arith.constant 0 : index
    %c0_1 = arith.constant 0 : index
    %c0_2 = arith.constant 0 : index
    %0 = vector.load %arg1[%c0, %c0_0, %c0_1, %c0_2] : memref<1x16x4x4xf32, #tpu.memory_space<vmem>>, vector<1x16x4x4xf32>
    %1 = vector.shape_cast %0 : vector<1x16x4x4xf32> to vector<16x4x4xf32>
    %2 = tpu.transpose %1, [0, 2, 1] : vector<16x4x4xf32> -> vector<16x4x4xf32>
    %3 = tpu.transpose %2, [1, 0, 2] : vector<16x4x4xf32> -> vector<4x16x4xf32>
    %4 = vector.shape_cast %3 : vector<4x16x4xf32> to vector<64x4xf32>
    %5 = arith.truncf %4 : vector<64x4xf32> to vector<64x4xbf16>
    %c0_3 = arith.constant 0 : index
    %c0_4 = arith.constant 0 : index
    %6 = vector.load %arg3[%c0_3, %c0_4] : memref<4x8xbf16, #tpu.memory_space<vmem>>, vector<4x8xbf16>
    %cst = arith.constant dense<0.000000e+00> : vector<64x8xf32>
    %7 = tpu.matmul %5, %6, %cst {dimension_numbers = #tpu.dot_dimension_numbers<[1], [0], [0], [1], [0, 0, 1, 1], [], []>} : vector<64x4xbf16>, vector<4x8xbf16>, vector<64x8xf32> -> vector<64x8xf32>
    %c0_5 = arith.constant 0 : index
    %c0_6 = arith.constant 0 : index
    %8 = vector.load %arg4[%c0_5, %c0_6] : memref<8x2xf32, #tpu.memory_space<vmem>>, vector<8x2xf32>
    %cst_7 = arith.constant dense<0.000000e+00> : vector<64x2xf32>
    %9 = tpu.matmul %7, %8, %cst_7 {dimension_numbers = #tpu.dot_dimension_numbers<[1], [0], [0], [1], [0, 0, 1, 1], [], []>} : vector<64x8xf32>, vector<8x2xf32>, vector<64x2xf32> -> vector<64x2xf32>
    %10 = vector.shape_cast %7 : vector<64x8xf32> to vector<4x16x8xf32>
    %11 = vector.shape_cast %9 : vector<64x2xf32> to vector<4x16x2xf32>
    %12 = vector.extract_strided_slice %11 {offsets = [0, 0, 0], sizes = [4, 16, 1], strides = [1, 1, 1]} : vector<4x16x2xf32> to vector<4x16x1xf32>
    %13 = vector.extract_strided_slice %11 {offsets = [0, 0, 1], sizes = [4, 16, 1], strides = [1, 1, 1]} : vector<4x16x2xf32> to vector<4x16x1xf32>
    %14 = tpu.transpose %13, [0, 2, 1] : vector<4x16x1xf32> -> vector<4x1x16xf32>
    %15 = vector.broadcast %12 : vector<4x16x1xf32> to vector<4x16x16xf32>
    %16 = vector.broadcast %14 : vector<4x1x16xf32> to vector<4x16x16xf32>
    %17 = arith.addf %15, %16 : vector<4x16x16xf32>
    %cst_8 = arith.constant 0.000000e+00 : f32
    %18 = vector.broadcast %cst_8 : f32 to vector<4x16x16xf32>
    %19 = arith.cmpf ogt, %17, %18 : vector<4x16x16xf32>
    %cst_9 = arith.constant 2.000000e-01 : f32
    %20 = vector.broadcast %cst_9 : f32 to vector<4x16x16xf32>
    %21 = arith.mulf %20, %17 : vector<4x16x16xf32>
    %22 = arith.select %19, %17, %21 : vector<4x16x16xi1>, vector<4x16x16xf32>
    %c0_10 = arith.constant 0 : index
    %c0_11 = arith.constant 0 : index
    %23 = vector.load %arg2[%c0_10, %c0_11] : memref<16x16xf32, #tpu.memory_space<vmem>>, vector<16x16xf32>
    %24 = vector.shape_cast %23 : vector<16x16xf32> to vector<1x16x16xf32>
    %25 = vector.broadcast %24 : vector<1x16x16xf32> to vector<4x16x16xf32>
    %26 = arith.addf %22, %25 : vector<4x16x16xf32>
    %cst_12 = arith.constant dense<0xFF800000> : vector<4x16xf32>
    %27 = vector.multi_reduction <maximumf>, %26, %cst_12 [2] : vector<4x16x16xf32> to vector<4x16xf32>
    %28 = vector.shape_cast %27 : vector<4x16xf32> to vector<4x16x1xf32>
    %29 = vector.broadcast %28 : vector<4x16x1xf32> to vector<4x16x16xf32>
    %30 = arith.subf %26, %29 : vector<4x16x16xf32>
    %31 = math.exp %30 : vector<4x16x16xf32>
    %cst_13 = arith.constant dense<0.000000e+00> : vector<4x16xf32>
    %32 = vector.multi_reduction <add>, %31, %cst_13 [2] : vector<4x16x16xf32> to vector<4x16xf32>
    %33 = vector.shape_cast %32 : vector<4x16xf32> to vector<4x16x1xf32>
    %34 = tpu.reciprocal %33 {approx = true} : vector<4x16x1xf32> -> vector<4x16x1xf32>
    %35 = vector.broadcast %34 : vector<4x16x1xf32> to vector<4x16x16xf32>
    %36 = arith.mulf %31, %35 : vector<4x16x16xf32>
    %37 = arith.truncf %36 : vector<4x16x16xf32> to vector<4x16x16xbf16>
    %38 = arith.truncf %10 : vector<4x16x8xf32> to vector<4x16x8xbf16>
    "tpu.trace_start"() <{level = 10 : i32, message = "tnm,tmo->tno"}> : () -> ()
    %cst_14 = arith.constant dense<0.000000e+00> : vector<4x16x8xf32>
    %39 = tpu.matmul %37, %38, %cst_14 {dimension_numbers = #tpu.dot_dimension_numbers<[2], [1], [1], [2], [0, 0, 0, 1, 1, 2], [0], [0]>} : vector<4x16x16xbf16>, vector<4x16x8xbf16>, vector<4x16x8xf32> -> vector<4x16x8xf32>
    %cst_15 = arith.constant 0.000000e+00 : f32
    "tpu.trace_stop"() : () -> ()
    %40 = vector.broadcast %cst_15 : f32 to vector<4x16x8xf32>
    %41 = arith.cmpf ogt, %39, %40 : vector<4x16x8xf32>
    %cst_16 = arith.constant 0.000000e+00 : f32
    %42 = vector.broadcast %cst_16 : f32 to vector<4x16x8xf32>
    %43 = arith.minimumf %39, %42 : vector<4x16x8xf32>
    %44 = math.exp %43 : vector<4x16x8xf32>
    %cst_17 = arith.constant 1.000000e+00 : f32
    %45 = vector.broadcast %cst_17 : f32 to vector<4x16x8xf32>
    %46 = arith.subf %44, %45 : vector<4x16x8xf32>
    %47 = arith.select %41, %39, %46 : vector<4x16x8xi1>, vector<4x16x8xf32>
    %48 = tpu.transpose %47, [1, 0, 2] : vector<4x16x8xf32> -> vector<16x4x8xf32>
    %49 = tpu.transpose %48, [0, 2, 1] : vector<16x4x8xf32> -> vector<16x8x4xf32>
    %c0_18 = arith.constant 0 : index
    %c0_19 = arith.constant 0 : index
    %c0_20 = arith.constant 0 : index
    %c0_21 = arith.constant 0 : index
    %50 = vector.load %arg5[%c0_18, %c0_19, %c0_20, %c0_21] : memref<1x16x8x4xf32, #tpu.memory_space<vmem>>, vector<1x16x8x4xf32>
    %51 = vector.shape_cast %50 : vector<1x16x8x4xf32> to vector<16x8x4xf32>
    %52 = vector.shape_cast %49 : vector<16x8x4xf32> to vector<1x16x8x4xf32>
    tpu.vector_store %arg5[%c0_18, %c0_19, %c0_20, %c0_21], %52 {strides = array<i32>} : memref<1x16x8x4xf32, #tpu.memory_space<vmem>>, vector<1x16x8x4xf32>,
    return
  }
  func.func @transform_0(%arg0: i32) -> (i32, i32, i32, i32) {
    %c0_i32 = arith.constant 0 : i32
    %c0_i32_0 = arith.constant 0 : i32
    %c0_i32_1 = arith.constant 0 : i32
    %c0_i32_2 = arith.constant 0 : i32
    return %arg0, %c0_i32, %c0_i32_0, %c0_i32_1 : i32, i32, i32, i32
  }
  func.func @transform_1(%arg0: i32) -> (i32, i32) {
    %c0_i32 = arith.constant 0 : i32
    %c0_i32_0 = arith.constant 0 : i32
    %c0_i32_1 = arith.constant 0 : i32
    return %c0_i32, %c0_i32_0 : i32, i32
  }
  func.func @transform_2(%arg0: i32) -> (i32, i32) {
    %c0_i32 = arith.constant 0 : i32
    %c0_i32_0 = arith.constant 0 : i32
    %c0_i32_1 = arith.constant 0 : i32
    return %c0_i32, %c0_i32_0 : i32, i32
  }
  func.func @transform_3(%arg0: i32) -> (i32, i32) {
    %c0_i32 = arith.constant 0 : i32
    %c0_i32_0 = arith.constant 0 : i32
    %c0_i32_1 = arith.constant 0 : i32
    return %c0_i32, %c0_i32_0 : i32, i32
  }
  func.func @transform_4(%arg0: i32) -> (i32, i32, i32, i32) {
    %c0_i32 = arith.constant 0 : i32
    %c0_i32_0 = arith.constant 0 : i32
    %c0_i32_1 = arith.constant 0 : i32
    %c0_i32_2 = arith.constant 0 : i32
    return %arg0, %c0_i32, %c0_i32_0, %c0_i32_1 : i32, i32, i32, i32
  }
}

</mosaic_0001>

<llo_original>
// kernel: tpu_custom_call.1
$region0: #{tpu_custom_call.1}
  #allocation0 [shape = 'u32[]', space=smem, size = 0x4, offset = 0x4, fixed_abs, tag = 'smem constant byte address 0x4 - core index']
  #allocation1 [shape = 'u32[144,128]{1,0:T(1,128)}', space=vmem, size = 0x12000, scoped, tag = 'internal scratch']
  %s0 = inlined_call_operand.vmem [shape: f32[2,16,4,4], index: 0, kind: input, shape index: {}]
  %s1 = inlined_call_operand.vmem [shape: f32[16,16], index: 1, kind: input, shape index: {}]
  %s2 = inlined_call_operand.vmem [shape: bf16[4,8], index: 2, kind: input, shape index: {}]
  %s3 = inlined_call_operand.vmem [shape: f32[8,2], index: 3, kind: input, shape index: {}]
  %s4 = inlined_call_operand.vmem [shape: f32[2,16,8,4], index: 4, kind: output, shape index: {}]
  %s5 = sld [smem:[#allocation0]]
  $region49: #{tpu_custom_call.1} parent=0
    _
  %s7 = ssub.s32 1, %s5
  %s8 = scalar_select 0, %s7, %s5
  loop: start=0, step=1, limit=4
  $region2: #{tpu_custom_call.1} parent=0 // loop_pre_header
    _
  $region3: #{tpu_custom_call.1} parent=0 // loop_header
    %s10 = sphi 0, %s14
    %p11 = scmp.ge.s32.totalorder %s10, 4
    %s20 = sphi 0, %s22
    %s23 = sphi 0, %s20
    %s24 = sphi 0, %s23
    %s40 = sphi 0, %s24
    %s44 = sphi 0, %s44
    %s46 = sphi 0, %s44
    %s47 = sphi 0, %s46
    %s61 = sphi 0, %s47
    %s65 = sphi 0, %s65
    %s67 = sphi 0, %s65
    %s68 = sphi 0, %s67
    %s82 = sphi 0, %s68
    %s86 = sphi 0, %s86
    %s88 = sphi 0, %s86
    %s89 = sphi 0, %s88
    %s103 = sphi 0, %s89
    %s109 = sphi 0, %s111
    %s112 = sphi 0, %s109
    %s113 = sphi 0, %s112
    %s129 = sphi 0, %s113
  $region4: #{tpu_custom_call.1} parent=0 // loop_header_branch
    %13 = sbr.rel (%p11) target = $region8
  $region5: #{tpu_custom_call.1} parent=0 // loop_body
    %s15 = ssub.s32 %s10, 1
    %s16 = ssub.s32 %s10, 2
    %s17 = sadd.s32 %s10, 1
    %s18 = ssub.s32 %s10, %s17
    %p19 = scmp.eq.s32.totalorder %s18, 0
    %s21 = sadd.s32 %s20, 1
    %s22 = scalar_select %p19, %s20, %s21
    %p25 = pneg %p19
    %p26 = scmp.eq.s32.totalorder %s10, 1
    %p27 = por %p25, %p26
    %p28 = scmp.ne.s32.totalorder %s20, %s23
    %p29 = scmp.eq.s32.totalorder %s10, 0
    %p30 = por %p28, %p29
    %p31 = scmp.ne.s32.totalorder %s20, %s23
    %p32 = scmp.eq.s32.totalorder %s15, 1
    %p33 = por %p31, %p32
    %p34 = scmp.ne.s32.totalorder %s23, %s24
    %p35 = scmp.eq.s32.totalorder %s15, 0
    %p36 = por %p34, %p35
    %p37 = scmp.ne.s32.totalorder %s23, %s24
    %p38 = scmp.eq.s32.totalorder %s16, 1
    %p39 = por %p37, %p38
    %p41 = scmp.ne.s32.totalorder %s24, %s40
    %p42 = scmp.eq.s32.totalorder %s16, 0
    %p43 = por %p41, %p42
    %s45 = sadd.s32 %s44, 1
    %p48 = scmp.eq.s32.totalorder %s10, 1
    %p49 = scmp.ne.s32.totalorder %s44, %s46
    %p50 = scmp.eq.s32.totalorder %s10, 0
    %p51 = por %p49, %p50
    %p52 = scmp.ne.s32.totalorder %s44, %s46
    %p53 = scmp.eq.s32.totalorder %s15, 1
    %p54 = por %p52, %p53
    %p55 = scmp.ne.s32.totalorder %s46, %s47
    %p56 = scmp.eq.s32.totalorder %s15, 0
    %p57 = por %p55, %p56
    %p58 = scmp.ne.s32.totalorder %s46, %s47
    %p59 = scmp.eq.s32.totalorder %s16, 1
    %p60 = por %p58, %p59
    %p62 = scmp.ne.s32.totalorder %s47, %s61
    %p63 = scmp.eq.s32.totalorder %s16, 0
    %p64 = por %p62, %p63
    %s66 = sadd.s32 %s65, 1
    %p69 = scmp.eq.s32.totalorder %s10, 1
    %p70 = scmp.ne.s32.totalorder %s65, %s67
    %p71 = scmp.eq.s32.totalorder %s10, 0
    %p72 = por %p70, %p71
    %p73 = scmp.ne.s32.totalorder %s65, %s67
    %p74 = scmp.eq.s32.totalorder %s15, 1
    %p75 = por %p73, %p74
    %p76 = scmp.ne.s32.totalorder %s67, %s68
    %p77 = scmp.eq.s32.totalorder %s15, 0
    %p78 = por %p76, %p77
    %p79 = scmp.ne.s32.totalorder %s67, %s68
    %p80 = scmp.eq.s32.totalorder %s16, 1
    %p81 = por %p79, %p80
    %p83 = scmp.ne.s32.totalorder %s68, %s82
    %p84 = scmp.eq.s32.totalorder %s16, 0
    %p85 = por %p83, %p84
    %s87 = sadd.s32 %s86, 1
    %p90 = scmp.eq.s32.totalorder %s10, 1
    %p91 = scmp.ne.s32.totalorder %s86, %s88
    %p92 = scmp.eq.s32.totalorder %s10, 0
    %p93 = por %p91, %p92
    %p94 = scmp.ne.s32.totalorder %s86, %s88
    %p95 = scmp.eq.s32.totalorder %s15, 1
    %p96 = por %p94, %p95
    %p97 = scmp.ne.s32.totalorder %s88, %s89
    %p98 = scmp.eq.s32.totalorder %s15, 0
    %p99 = por %p97, %p98
    %p100 = scmp.ne.s32.totalorder %s88, %s89
    %p101 = scmp.eq.s32.totalorder %s16, 1
    %p102 = por %p100, %p101
    %p104 = scmp.ne.s32.totalorder %s89, %s103
    %p105 = scmp.eq.s32.totalorder %s16, 0
    %p106 = por %p104, %p105
    %s107 = ssub.s32 %s10, %s17
    %p108 = scmp.eq.s32.totalorder %s107, 0
    %s110 = sadd.s32 %s109, 1
    %s111 = scalar_select %p108, %s109, %s110
    %p114 = pneg %p108
    %p115 = scmp.eq.s32.totalorder %s10, 1
    %p116 = por %p114, %p115
    %p117 = scmp.ne.s32.totalorder %s109, %s112
    %p118 = scmp.eq.s32.totalorder %s10, 0
    %p119 = por %p117, %p118
    %p120 = scmp.ne.s32.totalorder %s109, %s112
    %p121 = scmp.eq.s32.totalorder %s15, 1
    %p122 = por %p120, %p121
    %p123 = scmp.ne.s32.totalorder %s112, %s113
    %p124 = scmp.eq.s32.totalorder %s15, 0
    %p125 = por %p123, %p124
    %p126 = scmp.ne.s32.totalorder %s112, %s113
    %p127 = scmp.eq.s32.totalorder %s16, 1
    %p128 = por %p126, %p127
    %p130 = scmp.ne.s32.totalorder %s113, %s129
    %p131 = scmp.eq.s32.totalorder %s16, 0
    %p132 = por %p130, %p131
    %p133 = scmp.le.s32.totalorder 1, %s10
    %p134 = scmp.lt.s32.totalorder %s10, 3
    %p135 = pnand %p133, %p134
    %p136 = pneg %p135
    // Predicated region
    $region9: #{tpu_custom_call.1} parent=5 // pred_check
      _
    $region10: #{tpu_custom_call.1} parent=5 // pred_check_branch
      %138 = sbr.rel (%p135) target = $region12
    $region11: #{tpu_custom_call.1} parent=5 // pred_region
      %s139 = ssub.s32 %s10, 1
      // Predicated region
      $region13: #{tpu_custom_call.1} parent=11 // pred_check
        %p140 = pneg %p57
      $region14: #{tpu_custom_call.1} parent=11 // pred_check_branch
        %142 = sbr.rel (%p140) target = $region16
      $region15: #{tpu_custom_call.1} parent=11 // pred_region
        _
      $region16: #{tpu_custom_call.1} parent=11 // pred_fallthru
        _
      // Predicated region
      $region17: #{tpu_custom_call.1} parent=11 // pred_check
        %p143 = pneg %p78
      $region18: #{tpu_custom_call.1} parent=11 // pred_check_branch
        %145 = sbr.rel (%p143) target = $region20
      $region19: #{tpu_custom_call.1} parent=11 // pred_region
        _
      $region20: #{tpu_custom_call.1} parent=11 // pred_fallthru
        _
      // Predicated region
      $region21: #{tpu_custom_call.1} parent=11 // pred_check
        %p146 = pneg %p99
      $region22: #{tpu_custom_call.1} parent=11 // pred_check_branch
        %148 = sbr.rel (%p146) target = $region24
      $region23: #{tpu_custom_call.1} parent=11 // pred_region
        _
      $region24: #{tpu_custom_call.1} parent=11 // pred_fallthru
        _
    $region12: #{tpu_custom_call.1} parent=5 // pred_fallthru
      _
    %p149 = scmp.lt.s32.totalorder %s10, 2
    // Predicated region
    $region25: #{tpu_custom_call.1} parent=5 // pred_check
      %p150 = pneg %p149
    $region26: #{tpu_custom_call.1} parent=5 // pred_check_branch
      %152 = sbr.rel (%p150) target = $region28
    $region27: #{tpu_custom_call.1} parent=5 // pred_region
      // Predicated region
      $region29: #{tpu_custom_call.1} parent=27 // pred_check
        %p153 = pneg %p30
      $region30: #{tpu_custom_call.1} parent=27 // pred_check_branch
        %155 = sbr.rel (%p153) target = $region32
      $region31: #{tpu_custom_call.1} parent=27 // pred_region
        %p156 = scmp.lt.s32.totalorder %s10, 1
        %s157 = scalar_select %p156, %s10, 1
        %s158 = smul.addr %s157, 16
        %s159 = smul.addr %s158, 4
        %s160 = scalar_lea.vmem %s0, %s159
      $region32: #{tpu_custom_call.1} parent=27 // pred_fallthru
        _
    $region28: #{tpu_custom_call.1} parent=5 // pred_fallthru
      _
    %p161 = scmp.le.s32.totalorder 1, %s10
    %p162 = scmp.lt.s32.totalorder %s10, 3
    %p163 = pnand %p161, %p162
    %p164 = pneg %p163
    // Predicated region
    $region33: #{tpu_custom_call.1} parent=5 // pred_check
      _
    $region34: #{tpu_custom_call.1} parent=5 // pred_check_branch
      %166 = sbr.rel (%p163) target = $region36
    $region35: #{tpu_custom_call.1} parent=5 // pred_region
      %s167 = ssub.s32 %s10, 1
      %p168 = scmp.lt.s32.totalorder %s15, 1
      %s169 = scalar_select %p168, %s15, 1
      %s170 = smul.addr %s169, 16
      %s171 = smul.addr %s170, 4
      %s172 = scalar_lea.vmem %s0, %s171
      %p173 = pneg %p36
      %p174 = pneg %p33
      %p175 = pneg %p57
      %p176 = pneg %p54
      %p177 = pneg %p78
      %p178 = pneg %p75
      %p179 = pneg %p99
      %p180 = pneg %p96
      %p181 = pneg %p125
      %p182 = pneg %p122
      %p183 = scmp.lt.s32.totalorder %s15, 1
      %s184 = scalar_select %p183, %s15, 1
      %s185 = smul.addr %s184, 16
      %s186 = smul.addr %s185, 8
      %s187 = scalar_lea.vmem %s4, %s186
      %p188 = scmp.lt.s32.totalorder %s15, 1
      %s189 = scalar_select %p188, %s15, 1
      %s190 = smul.addr %s189, 16
      %s191 = smul.addr %s190, 4
      %s192 = scalar_lea.vmem %s0, %s191
      %p193 = scmp.lt.s32.totalorder %s15, 1
      %s194 = scalar_select %p193, %s15, 1
      %s195 = smul.addr %s194, 16
      %s196 = smul.addr %s195, 8
      %s197 = scalar_lea.vmem %s4, %s196
      %v199 = vld [vmem:[%s192] sm:$0xf]
      %v200 = vld [vmem:[%s192 + $0x4] sm:$0xf]
      %v201 = vld [vmem:[%s192 + $0x8] sm:$0xf]
      %v202 = vld [vmem:[%s192 + $0xc] sm:$0xf]
      %v203 = vld [vmem:[%s192 + $0x10] sm:$0xf]
      %v204 = vld [vmem:[%s192 + $0x14] sm:$0xf]
      %v205 = vld [vmem:[%s192 + $0x18] sm:$0xf]
      %v206 = vld [vmem:[%s192 + $0x1c] sm:$0xf]
      %v207 = vld [vmem:[%s192 + $0x20] sm:$0xf]
      %v208 = vld [vmem:[%s192 + $0x24] sm:$0xf]
      %v209 = vld [vmem:[%s192 + $0x28] sm:$0xf]
      %v210 = vld [vmem:[%s192 + $0x2c] sm:$0xf]
      %v211 = vld [vmem:[%s192 + $0x30] sm:$0xf]
      %v212 = vld [vmem:[%s192 + $0x34] sm:$0xf]
      %v213 = vld [vmem:[%s192 + $0x38] sm:$0xf]
      %v214 = vld [vmem:[%s192 + $0x3c] sm:$0xf]
      %215 = vxpose.xlu0.b32.start [1/16] %v199, 128
      %216 = vxpose.xlu0.b32.cont [2/16] 0.0, 128
      %217 = vxpose.xlu0.b32.cont [3/16] 0.0, 128
      %218 = vxpose.xlu0.b32.cont [4/16] 0.0, 128
      %219 = vxpose.xlu0.b32.cont [5/16] 0.0, 128
      %220 = vxpose.xlu0.b32.cont [6/16] 0.0, 128
      %221 = vxpose.xlu0.b32.cont [7/16] 0.0, 128
      %222 = vxpose.xlu0.b32.cont [8/16] 0.0, 128
      %223 = vxpose.xlu0.b32.cont [9/16] 0.0, 128
      %224 = vxpose.xlu0.b32.cont [10/16] 0.0, 128
      %225 = vxpose.xlu0.b32.cont [11/16] 0.0, 128
      %226 = vxpose.xlu0.b32.cont [12/16] 0.0, 128
      %227 = vxpose.xlu0.b32.cont [13/16] 0.0, 128
      %228 = vxpose.xlu0.b32.cont [14/16] 0.0, 128
      %229 = vxpose.xlu0.b32.cont [15/16] 0.0, 128
      %230 = vxpose.xlu0.b32.end [16/16] 0.0, 128
      %v231 = vpop.trf.xlu0
      %v232 = vpop.trf.xlu0
      %v233 = vpop.trf.xlu0
      %v234 = vpop.trf.xlu0
      %v235 = vpop.trf.xlu0
      %v236 = vpop.trf.xlu0
      %v237 = vpop.trf.xlu0
      %v238 = vpop.trf.xlu0
      %v239 = vpop.trf.xlu0
      %v240 = vpop.trf.xlu0
      %v241 = vpop.trf.xlu0
      %v242 = vpop.trf.xlu0
      %v243 = vpop.trf.xlu0
      %v244 = vpop.trf.xlu0
      %v245 = vpop.trf.xlu0
      %v246 = vpop.trf.xlu0
      %247 = vxpose.xlu0.b32.start [1/16] %v200, 128
      %248 = vxpose.xlu0.b32.cont [2/16] 0.0, 128
      %249 = vxpose.xlu0.b32.cont [3/16] 0.0, 128
      %250 = vxpose.xlu0.b32.cont [4/16] 0.0, 128
      %251 = vxpose.xlu0.b32.cont [5/16] 0.0, 128
      %252 = vxpose.xlu0.b32.cont [6/16] 0.0, 128
      %253 = vxpose.xlu0.b32.cont [7/16] 0.0, 128
      %254 = vxpose.xlu0.b32.cont [8/16] 0.0, 128
      %255 = vxpose.xlu0.b32.cont [9/16] 0.0, 128
      %256 = vxpose.xlu0.b32.cont [10/16] 0.0, 128
      %257 = vxpose.xlu0.b32.cont [11/16] 0.0, 128
      %258 = vxpose.xlu0.b32.cont [12/16] 0.0, 128
      %259 = vxpose.xlu0.b32.cont [13/16] 0.0, 128
      %260 = vxpose.xlu0.b32.cont [14/16] 0.0, 128
      %261 = vxpose.xlu0.b32.cont [15/16] 0.0, 128
      %262 = vxpose.xlu0.b32.end [16/16] 0.0, 128
      %v263 = vpop.trf.xlu0
      %v264 = vpop.trf.xlu0
      %v265 = vpop.trf.xlu0
      %v266 = vpop.trf.xlu0
      %v267 = vpop.trf.xlu0
      %v268 = vpop.trf.xlu0
      %v269 = vpop.trf.xlu0
      %v270 = vpop.trf.xlu0
      %v271 = vpop.trf.xlu0
      %v272 = vpop.trf.xlu0
      %v273 = vpop.trf.xlu0
      %v274 = vpop.trf.xlu0
      %v275 = vpop.trf.xlu0
      %v276 = vpop.trf.xlu0
      %v277 = vpop.trf.xlu0
      %v278 = vpop.trf.xlu0
      %279 = vxpose.xlu0.b32.start [1/16] %v201, 128
      %280 = vxpose.xlu0.b32.cont [2/16] 0.0, 128
      %281 = vxpose.xlu0.b32.cont [3/16] 0.0, 128
      %282 = vxpose.xlu0.b32.cont [4/16] 0.0, 128
      %283 = vxpose.xlu0.b32.cont [5/16] 0.0, 128
      %284 = vxpose.xlu0.b32.cont [6/16] 0.0, 128
      %285 = vxpose.xlu0.b32.cont [7/16] 0.0, 128
      %286 = vxpose.xlu0.b32.cont [8/16] 0.0, 128
      %287 = vxpose.xlu0.b32.cont [9/16] 0.0, 128
      %288 = vxpose.xlu0.b32.cont [10/16] 0.0, 128
      %289 = vxpose.xlu0.b32.cont [11/16] 0.0, 128
      %290 = vxpose.xlu0.b32.cont [12/16] 0.0, 128
      %291 = vxpose.xlu0.b32.cont [13/16] 0.0, 128
      %292 = vxpose.xlu0.b32.cont [14/16] 0.0, 128
      %293 = vxpose.xlu0.b32.cont [15/16] 0.0, 128
      %294 = vxpose.xlu0.b32.end [16/16] 0.0, 128
      %v295 = vpop.trf.xlu0
      %v296 = vpop.trf.xlu0
      %v297 = vpop.trf.xlu0
      %v298 = vpop.trf.xlu0
      %v299 = vpop.trf.xlu0
      %v300 = vpop.trf.xlu0
      %v301 = vpop.trf.xlu0
      %v302 = vpop.trf.xlu0
      %v303 = vpop.trf.xlu0
      %v304 = vpop.trf.xlu0
      %v305 = vpop.trf.xlu0
      %v306 = vpop.trf.xlu0
      %v307 = vpop.trf.xlu0
      %v308 = vpop.trf.xlu0
      %v309 = vpop.trf.xlu0
      %v310 = vpop.trf.xlu0
      %311 = vxpose.xlu0.b32.start [1/16] %v202, 128
      %312 = vxpose.xlu0.b32.cont [2/16] 0.0, 128
      %313 = vxpose.xlu0.b32.cont [3/16] 0.0, 128
      %314 = vxpose.xlu0.b32.cont [4/16] 0.0, 128
      %315 = vxpose.xlu0.b32.cont [5/16] 0.0, 128
      %316 = vxpose.xlu0.b32.cont [6/16] 0.0, 128
      %317 = vxpose.xlu0.b32.cont [7/16] 0.0, 128
      %318 = vxpose.xlu0.b32.cont [8/16] 0.0, 128
      %319 = vxpose.xlu0.b32.cont [9/16] 0.0, 128
      %320 = vxpose.xlu0.b32.cont [10/16] 0.0, 128
      %321 = vxpose.xlu0.b32.cont [11/16] 0.0, 128
      %322 = vxpose.xlu0.b32.cont [12/16] 0.0, 128
      %323 = vxpose.xlu0.b32.cont [13/16] 0.0, 128
      %324 = vxpose.xlu0.b32.cont [14/16] 0.0, 128
      %325 = vxpose.xlu0.b32.cont [15/16] 0.0, 128
      %326 = vxpose.xlu0.b32.end [16/16] 0.0, 128
      %v327 = vpop.trf.xlu0
      %v328 = vpop.trf.xlu0
      %v329 = vpop.trf.xlu0
      %v330 = vpop.trf.xlu0
      %v331 = vpop.trf.xlu0
      %v332 = vpop.trf.xlu0
      %v333 = vpop.trf.xlu0
      %v334 = vpop.trf.xlu0
      %v335 = vpop.trf.xlu0
      %v336 = vpop.trf.xlu0
      %v337 = vpop.trf.xlu0
      %v338 = vpop.trf.xlu0
      %v339 = vpop.trf.xlu0
      %v340 = vpop.trf.xlu0
      %v341 = vpop.trf.xlu0
      %v342 = vpop.trf.xlu0
      %343 = vxpose.xlu0.b32.start [1/16] %v203, 128
      %344 = vxpose.xlu0.b32.cont [2/16] 0.0, 128
      %345 = vxpose.xlu0.b32.cont [3/16] 0.0, 128
      %346 = vxpose.xlu0.b32.cont [4/16] 0.0, 128
      %347 = vxpose.xlu0.b32.cont [5/16] 0.0, 128
      %348 = vxpose.xlu0.b32.cont [6/16] 0.0, 128
      %349 = vxpose.xlu0.b32.cont [7/16] 0.0, 128
      %350 = vxpose.xlu0.b32.cont [8/16] 0.0, 128
      %351 = vxpose.xlu0.b32.cont [9/16] 0.0, 128
      %352 = vxpose.xlu0.b32.cont [10/16] 0.0, 128
      %353 = vxpose.xlu0.b32.cont [11/16] 0.0, 128
      %354 = vxpose.xlu0.b32.cont [12/16] 0.0, 128
      %355 = vxpose.xlu0.b32.cont [13/16] 0.0, 128
      %356 = vxpose.xlu0.b32.cont [14/16] 0.0, 128
      %357 = vxpose.xlu0.b32.cont [15/16] 0.0, 128
      %358 = vxpose.xlu0.b32.end [16/16] 0.0, 128
      %v359 = vpop.trf.xlu0
      %v360 = vpop.trf.xlu0
      %v361 = vpop.trf.xlu0
      %v362 = vpop.trf.xlu0
      %v363 = vpop.trf.xlu0
      %v364 = vpop.trf.xlu0
      %v365 = vpop.trf.xlu0
      %v366 = vpop.trf.xlu0
      %v367 = vpop.trf.xlu0
      %v368 = vpop.trf.xlu0
      %v369 = vpop.trf.xlu0
      %v370 = vpop.trf.xlu0
      %v371 = vpop.trf.xlu0
      %v372 = vpop.trf.xlu0
      %v373 = vpop.trf.xlu0
      %v374 = vpop.trf.xlu0
      %375 = vxpose.xlu0.b32.start [1/16] %v204, 128
      %376 = vxpose.xlu0.b32.cont [2/16] 0.0, 128
      %377 = vxpose.xlu0.b32.cont [3/16] 0.0, 128
      %378 = vxpose.xlu0.b32.cont [4/16] 0.0, 128
      %379 = vxpose.xlu0.b32.cont [5/16] 0.0, 128
      %380 = vxpose.xlu0.b32.cont [6/16] 0.0, 128
      %381 = vxpose.xlu0.b32.cont [7/16] 0.0, 128
      %382 = vxpose.xlu0.b32.cont [8/16] 0.0, 128
      %383 = vxpose.xlu0.b32.cont [9/16] 0.0, 128
      %384 = vxpose.xlu0.b32.cont [10/16] 0.0, 128
      %385 = vxpose.xlu0.b32.cont [11/16] 0.0, 128
      %386 = vxpose.xlu0.b32.cont [12/16] 0.0, 128
      %387 = vxpose.xlu0.b32.cont [13/16] 0.0, 128
      %388 = vxpose.xlu0.b32.cont [14/16] 0.0, 128
      %389 = vxpose.xlu0.b32.cont [15/16] 0.0, 128
      %390 = vxpose.xlu0.b32.end [16/16] 0.0, 128
      %v391 = vpop.trf.xlu0
      %v392 = vpop.trf.xlu0
      %v393 = vpop.trf.xlu0
      %v394 = vpop.trf.xlu0
      %v395 = vpop.trf.xlu0
      %v396 = vpop.trf.xlu0
      %v397 = vpop.trf.xlu0
      %v398 = vpop.trf.xlu0
      %v399 = vpop.trf.xlu0
      %v400 = vpop.trf.xlu0
      %v401 = vpop.trf.xlu0
      %v402 = vpop.trf.xlu0
      %v403 = vpop.trf.xlu0
      %v404 = vpop.trf.xlu0
      %v405 = vpop.trf.xlu0
      %v406 = vpop.trf.xlu0
      %407 = vxpose.xlu0.b32.start [1/16] %v205, 128
      %408 = vxpose.xlu0.b32.cont [2/16] 0.0, 128
      %409 = vxpose.xlu0.b32.cont [3/16] 0.0, 128
      %410 = vxpose.xlu0.b32.cont [4/16] 0.0, 128
      %411 = vxpose.xlu0.b32.cont [5/16] 0.0, 128
      %412 = vxpose.xlu0.b32.cont [6/16] 0.0, 128
      %413 = vxpose.xlu0.b32.cont [7/16] 0.0, 128
      %414 = vxpose.xlu0.b32.cont [8/16] 0.0, 128
      %415 = vxpose.xlu0.b32.cont [9/16] 0.0, 128
      %416 = vxpose.xlu0.b32.cont [10/16] 0.0, 128
      %417 = vxpose.xlu0.b32.cont [11/16] 0.0, 128
      %418 = vxpose.xlu0.b32.cont [12/16] 0.0, 128
      %419 = vxpose.xlu0.b32.cont [13/16] 0.0, 128
      %420 = vxpose.xlu0.b32.cont [14/16] 0.0, 128
      %421 = vxpose.xlu0.b32.cont [15/16] 0.0, 128
      %422 = vxpose.xlu0.b32.end [16/16] 0.0, 128
      %v423 = vpop.trf.xlu0
      %v424 = vpop.trf.xlu0
      %v425 = vpop.trf.xlu0
      %v426 = vpop.trf.xlu0
      %v427 = vpop.trf.xlu0
      %v428 = vpop.trf.xlu0
      %v429 = vpop.trf.xlu0
      %v430 = vpop.trf.xlu0
      %v431 = vpop.trf.xlu0
      %v432 = vpop.trf.xlu0
      %v433 = vpop.trf.xlu0
      %v434 = vpop.trf.xlu0
      %v435 = vpop.trf.xlu0
      %v436 = vpop.trf.xlu0
      %v437 = vpop.trf.xlu0
      %v438 = vpop.trf.xlu0
      %439 = vxpose.xlu0.b32.start [1/16] %v206, 128
      %440 = vxpose.xlu0.b32.cont [2/16] 0.0, 128
      %441 = vxpose.xlu0.b32.cont [3/16] 0.0, 128
      %442 = vxpose.xlu0.b32.cont [4/16] 0.0, 128
      %443 = vxpose.xlu0.b32.cont [5/16] 0.0, 128
      %444 = vxpose.xlu0.b32.cont [6/16] 0.0, 128
      %445 = vxpose.xlu0.b32.cont [7/16] 0.0, 128
      %446 = vxpose.xlu0.b32.cont [8/16] 0.0, 128
      %447 = vxpose.xlu0.b32.cont [9/16] 0.0, 128
      %448 = vxpose.xlu0.b32.cont [10/16] 0.0, 128
      %449 = vxpose.xlu0.b32.cont [11/16] 0.0, 128
      %450 = vxpose.xlu0.b32.cont [12/16] 0.0, 128
      %451 = vxpose.xlu0.b32.cont [13/16] 0.0, 128
      %452 = vxpose.xlu0.b32.cont [14/16] 0.0, 128
      %453 = vxpose.xlu0.b32.cont [15/16] 0.0, 128
      %454 = vxpose.xlu0.b32.end [16/16] 0.0, 128
      %v455 = vpop.trf.xlu0
      %v456 = vpop.trf.xlu0
      %v457 = vpop.trf.xlu0
      %v458 = vpop.trf.xlu0
      %v459 = vpop.trf.xlu0
      %v460 = vpop.trf.xlu0
      %v461 = vpop.trf.xlu0
      %v462 = vpop.trf.xlu0
      %v463 = vpop.trf.xlu0
      %v464 = vpop.trf.xlu0
      %v465 = vpop.trf.xlu0
      %v466 = vpop.trf.xlu0
      %v467 = vpop.trf.xlu0
      %v468 = vpop.trf.xlu0
      %v469 = vpop.trf.xlu0
      %v470 = vpop.trf.xlu0
      %471 = vxpose.xlu0.b32.start [1/16] %v207, 128
      %472 = vxpose.xlu0.b32.cont [2/16] 0.0, 128
      %473 = vxpose.xlu0.b32.cont [3/16] 0.0, 128
      %474 = vxpose.xlu0.b32.cont [4/16] 0.0, 128
      %475 = vxpose.xlu0.b32.cont [5/16] 0.0, 128
      %476 = vxpose.xlu0.b32.cont [6/16] 0.0, 128
      %477 = vxpose.xlu0.b32.cont [7/16] 0.0, 128
      %478 = vxpose.xlu0.b32.cont [8/16] 0.0, 128
      %479 = vxpose.xlu0.b32.cont [9/16] 0.0, 128
      %480 = vxpose.xlu0.b32.cont [10/16] 0.0, 128
      %481 = vxpose.xlu0.b32.cont [11/16] 0.0, 128
      %482 = vxpose.xlu0.b32.cont [12/16] 0.0, 128
      %483 = vxpose.xlu0.b32.cont [13/16] 0.0, 128
      %484 = vxpose.xlu0.b32.cont [14/16] 0.0, 128
      %485 = vxpose.xlu0.b32.cont [15/16] 0.0, 128
      %486 = vxpose.xlu0.b32.end [16/16] 0.0, 128
      %v487 = vpop.trf.xlu0
      %v488 = vpop.trf.xlu0
      %v489 = vpop.trf.xlu0
      %v490 = vpop.trf.xlu0
      %v491 = vpop.trf.xlu0
      %v492 = vpop.trf.xlu0
      %v493 = vpop.trf.xlu0
      %v494 = vpop.trf.xlu0
      %v495 = vpop.trf.xlu0
      %v496 = vpop.trf.xlu0
      %v497 = vpop.trf.xlu0
      %v498 = vpop.trf.xlu0
      %v499 = vpop.trf.xlu0
      %v500 = vpop.trf.xlu0
      %v501 = vpop.trf.xlu0
      %v502 = vpop.trf.xlu0
      %503 = vxpose.xlu0.b32.start [1/16] %v208, 128
      %504 = vxpose.xlu0.b32.cont [2/16] 0.0, 128
      %505 = vxpose.xlu0.b32.cont [3/16] 0.0, 128
      %506 = vxpose.xlu0.b32.cont [4/16] 0.0, 128
      %507 = vxpose.xlu0.b32.cont [5/16] 0.0, 128
      %508 = vxpose.xlu0.b32.cont [6/16] 0.0, 128
      %509 = vxpose.xlu0.b32.cont [7/16] 0.0, 128
      %510 = vxpose.xlu0.b32.cont [8/16] 0.0, 128
      %511 = vxpose.xlu0.b32.cont [9/16] 0.0, 128
      %512 = vxpose.xlu0.b32.cont [10/16] 0.0, 128
      %513 = vxpose.xlu0.b32.cont [11/16] 0.0, 128
      %514 = vxpose.xlu0.b32.cont [12/16] 0.0, 128
      %515 = vxpose.xlu0.b32.cont [13/16] 0.0, 128
      %516 = vxpose.xlu0.b32.cont [14/16] 0.0, 128
      %517 = vxpose.xlu0.b32.cont [15/16] 0.0, 128
      %518 = vxpose.xlu0.b32.end [16/16] 0.0, 128
      %v519 = vpop.trf.xlu0
      %v520 = vpop.trf.xlu0
      %v521 = vpop.trf.xlu0
      %v522 = vpop.trf.xlu0
      %v523 = vpop.trf.xlu0
      %v524 = vpop.trf.xlu0
      %v525 = vpop.trf.xlu0
      %v526 = vpop.trf.xlu0
      %v527 = vpop.trf.xlu0
      %v528 = vpop.trf.xlu0
      %v529 = vpop.trf.xlu0
      %v530 = vpop.trf.xlu0
      %v531 = vpop.trf.xlu0
      %v532 = vpop.trf.xlu0
      %v533 = vpop.trf.xlu0
      %v534 = vpop.trf.xlu0
      %535 = vxpose.xlu0.b32.start [1/16] %v209, 128
      %536 = vxpose.xlu0.b32.cont [2/16] 0.0, 128
      %537 = vxpose.xlu0.b32.cont [3/16] 0.0, 128
      %538 = vxpose.xlu0.b32.cont [4/16] 0.0, 128
      %539 = vxpose.xlu0.b32.cont [5/16] 0.0, 128
      %540 = vxpose.xlu0.b32.cont [6/16] 0.0, 128
      %541 = vxpose.xlu0.b32.cont [7/16] 0.0, 128
      %542 = vxpose.xlu0.b32.cont [8/16] 0.0, 128
      %543 = vxpose.xlu0.b32.cont [9/16] 0.0, 128
      %544 = vxpose.xlu0.b32.cont [10/16] 0.0, 128
      %545 = vxpose.xlu0.b32.cont [11/16] 0.0, 128
      %546 = vxpose.xlu0.b32.cont [12/16] 0.0, 128
      %547 = vxpose.xlu0.b32.cont [13/16] 0.0, 128
      %548 = vxpose.xlu0.b32.cont [14/16] 0.0, 128
      %549 = vxpose.xlu0.b32.cont [15/16] 0.0, 128
      %550 = vxpose.xlu0.b32.end [16/16] 0.0, 128
      %v551 = vpop.trf.xlu0
      %v552 = vpop.trf.xlu0
      %v553 = vpop.trf.xlu0
      %v554 = vpop.trf.xlu0
      %v555 = vpop.trf.xlu0
      %v556 = vpop.trf.xlu0
      %v557 = vpop.trf.xlu0
      %v558 = vpop.trf.xlu0
      %v559 = vpop.trf.xlu0
      %v560 = vpop.trf.xlu0
      %v561 = vpop.trf.xlu0
      %v562 = vpop.trf.xlu0
      %v563 = vpop.trf.xlu0
      %v564 = vpop.trf.xlu0
      %v565 = vpop.trf.xlu0
      %v566 = vpop.trf.xlu0
      %567 = vxpose.xlu0.b32.start [1/16] %v210, 128
      %568 = vxpose.xlu0.b32.cont [2/16] 0.0, 128
      %569 = vxpose.xlu0.b32.cont [3/16] 0.0, 128
      %570 = vxpose.xlu0.b32.cont [4/16] 0.0, 128
      %571 = vxpose.xlu0.b32.cont [5/16] 0.0, 128
      %572 = vxpose.xlu0.b32.cont [6/16] 0.0, 128
      %573 = vxpose.xlu0.b32.cont [7/16] 0.0, 128
      %574 = vxpose.xlu0.b32.cont [8/16] 0.0, 128
      %575 = vxpose.xlu0.b32.cont [9/16] 0.0, 128
      %576 = vxpose.xlu0.b32.cont [10/16] 0.0, 128
      %577 = vxpose.xlu0.b32.cont [11/16] 0.0, 128
      %578 = vxpose.xlu0.b32.cont [12/16] 0.0, 128
      %579 = vxpose.xlu0.b32.cont [13/16] 0.0, 128
      %580 = vxpose.xlu0.b32.cont [14/16] 0.0, 128
      %581 = vxpose.xlu0.b32.cont [15/16] 0.0, 128
      %582 = vxpose.xlu0.b32.end [16/16] 0.0, 128
      %v583 = vpop.trf.xlu0
      %v584 = vpop.trf.xlu0
      %v585 = vpop.trf.xlu0
      %v586 = vpop.trf.xlu0
      %v587 = vpop.trf.xlu0
      %v588 = vpop.trf.xlu0
      %v589 = vpop.trf.xlu0
      %v590 = vpop.trf.xlu0
      %v591 = vpop.trf.xlu0
      %v592 = vpop.trf.xlu0
      %v593 = vpop.trf.xlu0
      %v594 = vpop.trf.xlu0
      %v595 = vpop.trf.xlu0
      %v596 = vpop.trf.xlu0
      %v597 = vpop.trf.xlu0
      %v598 = vpop.trf.xlu0
      %599 = vxpose.xlu0.b32.start [1/16] %v211, 128
      %600 = vxpose.xlu0.b32.cont [2/16] 0.0, 128
      %601 = vxpose.xlu0.b32.cont [3/16] 0.0, 128
      %602 = vxpose.xlu0.b32.cont [4/16] 0.0, 128
      %603 = vxpose.xlu0.b32.cont [5/16] 0.0, 128
      %604 = vxpose.xlu0.b32.cont [6/16] 0.0, 128
      %605 = vxpose.xlu0.b32.cont [7/16] 0.0, 128
      %606 = vxpose.xlu0.b32.cont [8/16] 0.0, 128
      %607 = vxpose.xlu0.b32.cont [9/16] 0.0, 128
      %608 = vxpose.xlu0.b32.cont [10/16] 0.0, 128
      %609 = vxpose.xlu0.b32.cont [11/16] 0.0, 128
      %610 = vxpose.xlu0.b32.cont [12/16] 0.0, 128
      %611 = vxpose.xlu0.b32.cont [13/16] 0.0, 128
      %612 = vxpose.xlu0.b32.cont [14/16] 0.0, 128
      %613 = vxpose.xlu0.b32.cont [15/16] 0.0, 128
      %614 = vxpose.xlu0.b32.end [16/16] 0.0, 128
      %v615 = vpop.trf.xlu0
      %v616 = vpop.trf.xlu0
      %v617 = vpop.trf.xlu0
      %v618 = vpop.trf.xlu0
      %v619 = vpop.trf.xlu0
      %v620 = vpop.trf.xlu0
      %v621 = vpop.trf.xlu0
      %v622 = vpop.trf.xlu0
      %v623 = vpop.trf.xlu0
      %v624 = vpop.trf.xlu0
      %v625 = vpop.trf.xlu0
      %v626 = vpop.trf.xlu0
      %v627 = vpop.trf.xlu0
      %v628 = vpop.trf.xlu0
      %v629 = vpop.trf.xlu0
      %v630 = vpop.trf.xlu0
      %631 = vxpose.xlu0.b32.start [1/16] %v212, 128
      %632 = vxpose.xlu0.b32.cont [2/16] 0.0, 128
      %633 = vxpose.xlu0.b32.cont [3/16] 0.0, 128
      %634 = vxpose.xlu0.b32.cont [4/16] 0.0, 128
      %635 = vxpose.xlu0.b32.cont [5/16] 0.0, 128
      %636 = vxpose.xlu0.b32.cont [6/16] 0.0, 128
      %637 = vxpose.xlu0.b32.cont [7/16] 0.0, 128
      %638 = vxpose.xlu0.b32.cont [8/16] 0.0, 128
      %639 = vxpose.xlu0.b32.cont [9/16] 0.0, 128
      %640 = vxpose.xlu0.b32.cont [10/16] 0.0, 128
      %641 = vxpose.xlu0.b32.cont [11/16] 0.0, 128
      %642 = vxpose.xlu0.b32.cont [12/16] 0.0, 128
      %643 = vxpose.xlu0.b32.cont [13/16] 0.0, 128
      %644 = vxpose.xlu0.b32.cont [14/16] 0.0, 128
      %645 = vxpose.xlu0.b32.cont [15/16] 0.0, 128
      %646 = vxpose.xlu0.b32.end [16/16] 0.0, 128
      %v647 = vpop.trf.xlu0
      %v648 = vpop.trf.xlu0
      %v649 = vpop.trf.xlu0
      %v650 = vpop.trf.xlu0
      %v651 = vpop.trf.xlu0
      %v652 = vpop.trf.xlu0
      %v653 = vpop.trf.xlu0
      %v654 = vpop.trf.xlu0
      %v655 = vpop.trf.xlu0
      %v656 = vpop.trf.xlu0
      %v657 = vpop.trf.xlu0
      %v658 = vpop.trf.xlu0
      %v659 = vpop.trf.xlu0
      %v660 = vpop.trf.xlu0
      %v661 = vpop.trf.xlu0
      %v662 = vpop.trf.xlu0
      %663 = vxpose.xlu0.b32.start [1/16] %v213, 128
      %664 = vxpose.xlu0.b32.cont [2/16] 0.0, 128
      %665 = vxpose.xlu0.b32.cont [3/16] 0.0, 128
      %666 = vxpose.xlu0.b32.cont [4/16] 0.0, 128
      %667 = vxpose.xlu0.b32.cont [5/16] 0.0, 128
      %668 = vxpose.xlu0.b32.cont [6/16] 0.0, 128
      %669 = vxpose.xlu0.b32.cont [7/16] 0.0, 128
      %670 = vxpose.xlu0.b32.cont [8/16] 0.0, 128
      %671 = vxpose.xlu0.b32.cont [9/16] 0.0, 128
      %672 = vxpose.xlu0.b32.cont [10/16] 0.0, 128
      %673 = vxpose.xlu0.b32.cont [11/16] 0.0, 128
      %674 = vxpose.xlu0.b32.cont [12/16] 0.0, 128
      %675 = vxpose.xlu0.b32.cont [13/16] 0.0, 128
      %676 = vxpose.xlu0.b32.cont [14/16] 0.0, 128
      %677 = vxpose.xlu0.b32.cont [15/16] 0.0, 128
      %678 = vxpose.xlu0.b32.end [16/16] 0.0, 128
      %v679 = vpop.trf.xlu0
      %v680 = vpop.trf.xlu0
      %v681 = vpop.trf.xlu0
      %v682 = vpop.trf.xlu0
      %v683 = vpop.trf.xlu0
      %v684 = vpop.trf.xlu0
      %v685 = vpop.trf.xlu0
      %v686 = vpop.trf.xlu0
      %v687 = vpop.trf.xlu0
      %v688 = vpop.trf.xlu0
      %v689 = vpop.trf.xlu0
      %v690 = vpop.trf.xlu0
      %v691 = vpop.trf.xlu0
      %v692 = vpop.trf.xlu0
      %v693 = vpop.trf.xlu0
      %v694 = vpop.trf.xlu0
      %695 = vxpose.xlu0.b32.start [1/16] %v214, 128
      %696 = vxpose.xlu0.b32.cont [2/16] 0.0, 128
      %697 = vxpose.xlu0.b32.cont [3/16] 0.0, 128
      %698 = vxpose.xlu0.b32.cont [4/16] 0.0, 128
      %699 = vxpose.xlu0.b32.cont [5/16] 0.0, 128
      %700 = vxpose.xlu0.b32.cont [6/16] 0.0, 128
      %701 = vxpose.xlu0.b32.cont [7/16] 0.0, 128
      %702 = vxpose.xlu0.b32.cont [8/16] 0.0, 128
      %703 = vxpose.xlu0.b32.cont [9/16] 0.0, 128
      %704 = vxpose.xlu0.b32.cont [10/16] 0.0, 128
      %705 = vxpose.xlu0.b32.cont [11/16] 0.0, 128
      %706 = vxpose.xlu0.b32.cont [12/16] 0.0, 128
      %707 = vxpose.xlu0.b32.cont [13/16] 0.0, 128
      %708 = vxpose.xlu0.b32.cont [14/16] 0.0, 128
      %709 = vxpose.xlu0.b32.cont [15/16] 0.0, 128
      %710 = vxpose.xlu0.b32.end [16/16] 0.0, 128
      %v711 = vpop.trf.xlu0
      %v712 = vpop.trf.xlu0
      %v713 = vpop.trf.xlu0
      %v714 = vpop.trf.xlu0
      %v715 = vpop.trf.xlu0
      %v716 = vpop.trf.xlu0
      %v717 = vpop.trf.xlu0
      %v718 = vpop.trf.xlu0
      %v719 = vpop.trf.xlu0
      %v720 = vpop.trf.xlu0
      %v721 = vpop.trf.xlu0
      %v722 = vpop.trf.xlu0
      %v723 = vpop.trf.xlu0
      %v724 = vpop.trf.xlu0
      %v725 = vpop.trf.xlu0
      %v726 = vpop.trf.xlu0
      %v727 = vcombine.low %v231, %v295
      %v729 = vunpack.c.l.s4 1983009808
      %v730 = vunpack.c.0.s8 %v729
      %v731 = vlaneseq
      %v732 = vshrl.u32 %v731, 7
      %v733 = vsub.s32 %v730, %v732
      %v734 = vrot.slane %v727, %v733
      %v735 = vcombine.low %v263, %v327
      %v737 = vunpack.c.l.s4 1983009808
      %v738 = vunpack.c.0.s8 %v737
      %v739 = vlaneseq
      %v740 = vshrl.u32 %v739, 7
      %v741 = vsub.s32 %v738, %v740
      %v742 = vrot.slane %v735, %v741
      %v743 = vcombine.low %v359, %v423
      %v745 = vunpack.c.l.s4 1983009808
      %v746 = vunpack.c.0.s8 %v745
      %v747 = vlaneseq
      %v748 = vshrl.u32 %v747, 7
      %v749 = vsub.s32 %v746, %v748
      %v750 = vrot.slane %v743, %v749
      %v751 = vcombine.low %v391, %v455
      %v753 = vunpack.c.l.s4 1983009808
      %v754 = vunpack.c.0.s8 %v753
      %v755 = vlaneseq
      %v756 = vshrl.u32 %v755, 7
      %v757 = vsub.s32 %v754, %v756
      %v758 = vrot.slane %v751, %v757
      %v759 = vcombine.low %v734, %v742
      %v760 = vcombine.high %v734, %v742
      %v762 = vunpack.c.l.s4 1934713408
      %v763 = vunpack.c.0.s8 %v762
      %v764 = vlaneseq
      %v765 = vshrl.u32 %v764, 7
      %v766 = vsub.s32 %v763, %v765
      %v767 = vrot.slane %v759, %v766
      %v769 = vunpack.c.l.s4 1934713408
      %v770 = vunpack.c.0.s8 %v769
      %v771 = vlaneseq
      %v772 = vshrl.u32 %v771, 7
      %v773 = vsub.s32 %v770, %v772
      %v774 = vrot.slane %v760, %v773
      %v775 = vcombine.low %v750, %v758
      %v776 = vcombine.high %v750, %v758
      %v778 = vunpack.c.l.s4 1934713408
      %v779 = vunpack.c.0.s8 %v778
      %v780 = vlaneseq
      %v781 = vshrl.u32 %v780, 7
      %v782 = vsub.s32 %v779, %v781
      %v783 = vrot.slane %v775, %v782
      %v785 = vunpack.c.l.s4 1934713408
      %v786 = vunpack.c.0.s8 %v785
      %v787 = vlaneseq
      %v788 = vshrl.u32 %v787, 7
      %v789 = vsub.s32 %v786, %v788
      %v790 = vrot.slane %v776, %v789
      %v791 = vcombine.low %v767, %v783
      %v792 = vcombine.high %v767, %v783
      %v793 = vcombine.low %v774, %v790
      %v794 = vcombine.high %v774, %v790
      %v795 = vcombine.low %v487, %v551
      %v797 = vunpack.c.l.s4 1983009808
      %v798 = vunpack.c.0.s8 %v797
      %v799 = vlaneseq
      %v800 = vshrl.u32 %v799, 7
      %v801 = vsub.s32 %v798, %v800
      %v802 = vrot.slane %v795, %v801
      %v803 = vcombine.low %v519, %v583
      %v805 = vunpack.c.l.s4 1983009808
      %v806 = vunpack.c.0.s8 %v805
      %v807 = vlaneseq
      %v808 = vshrl.u32 %v807, 7
      %v809 = vsub.s32 %v806, %v808
      %v810 = vrot.slane %v803, %v809
      %v811 = vcombine.low %v615, %v679
      %v813 = vunpack.c.l.s4 1983009808
      %v814 = vunpack.c.0.s8 %v813
      %v815 = vlaneseq
      %v816 = vshrl.u32 %v815, 7
      %v817 = vsub.s32 %v814, %v816
      %v818 = vrot.slane %v811, %v817
      %v819 = vcombine.low %v647, %v711
      %v821 = vunpack.c.l.s4 1983009808
      %v822 = vunpack.c.0.s8 %v821
      %v823 = vlaneseq
      %v824 = vshrl.u32 %v823, 7
      %v825 = vsub.s32 %v822, %v824
      %v826 = vrot.slane %v819, %v825
      %v827 = vcombine.low %v802, %v810
      %v828 = vcombine.high %v802, %v810
      %v830 = vunpack.c.l.s4 1934713408
      %v831 = vunpack.c.0.s8 %v830
      %v832 = vlaneseq
      %v833 = vshrl.u32 %v832, 7
      %v834 = vsub.s32 %v831, %v833
      %v835 = vrot.slane %v827, %v834
      %v837 = vunpack.c.l.s4 1934713408
      %v838 = vunpack.c.0.s8 %v837
      %v839 = vlaneseq
      %v840 = vshrl.u32 %v839, 7
      %v841 = vsub.s32 %v838, %v840
      %v842 = vrot.slane %v828, %v841
      %v843 = vcombine.low %v818, %v826
      %v844 = vcombine.high %v818, %v826
      %v846 = vunpack.c.l.s4 1934713408
      %v847 = vunpack.c.0.s8 %v846
      %v848 = vlaneseq
      %v849 = vshrl.u32 %v848, 7
      %v850 = vsub.s32 %v847, %v849
      %v851 = vrot.slane %v843, %v850
      %v853 = vunpack.c.l.s4 1934713408
      %v854 = vunpack.c.0.s8 %v853
      %v855 = vlaneseq
      %v856 = vshrl.u32 %v855, 7
      %v857 = vsub.s32 %v854, %v856
      %v858 = vrot.slane %v844, %v857
      %v859 = vcombine.low %v835, %v851
      %v860 = vcombine.high %v835, %v851
      %v861 = vcombine.low %v842, %v858
      %v862 = vcombine.high %v842, %v858
      %v863 = vpack.c.bf16 %v859, %v791
      %v864 = vpack.c.bf16 %v860, %v792
      %v865 = vpack.c.bf16 %v861, %v793
      %v866 = vpack.c.bf16 %v862, %v794
      %v867 = vld [vmem:[%s2] sm:$0x3]
      %vm868 = vcmask 31744
      %v870 = vsel %vm868, %v863, 0
      %v873 = vsel %vm868, %v864, 0
      %v876 = vsel %vm868, %v865, 0
      %v879 = vsel %vm868, %v866, 0
      %vm881 = vcmask 1041408
      %v883 = vsel %vm881, %v867, 0
      %885 = vmatprep.subr.bf16.mxu0 0
      %886 = vmatpush1.bf16.msra.mxu0 %v883
      %887 = vmatprep.subr.bf16.mxu0 0
      %888 = vmatpush1.bf16.msra.mxu0 0
      %889 = vmatprep.subr.bf16.mxu0 0
      %890 = vmatpush1.bf16.msra.mxu0 0
      %891 = vmatprep.subr.bf16.mxu0 0
      %892 = vmatpush1.bf16.msra.mxu0 0
      %893 = vmatprep.subr.bf16.mxu0 0
      %894 = vmatpush1.bf16.msra.mxu0 0
      %895 = vmatprep.subr.bf16.mxu0 0
      %896 = vmatpush1.bf16.msra.mxu0 0
      %897 = vmatprep.subr.bf16.mxu0 0
      %898 = vmatpush1.bf16.msra.mxu0 0
      %899 = vmatprep.subr.bf16.mxu0 0
      %900 = vmatpush1.bf16.msra.mxu0 0
      %901 = vmatprep.subr.bf16.mxu0 0
      %902 = vmatpush1.bf16.msra.mxu0 0
      %903 = vmatprep.subr.bf16.mxu0 0
      %904 = vmatpush1.bf16.msra.mxu0 0
      %905 = vmatprep.subr.bf16.mxu0 0
      %906 = vmatpush1.bf16.msra.mxu0 0
      %907 = vmatprep.subr.bf16.mxu0 0
      %908 = vmatpush1.bf16.msra.mxu0 0
      %909 = vmatprep.subr.bf16.mxu0 0
      %910 = vmatpush1.bf16.msra.mxu0 0
      %911 = vmatprep.subr.bf16.mxu0 0
      %912 = vmatpush1.bf16.msra.mxu0 0
      %913 = vmatprep.subr.bf16.mxu0 0
      %914 = vmatpush1.bf16.msra.mxu0 0
      %915 = vmatprep.subr.bf16.mxu0 0
      %916 = vmatpush1.bf16.msra.mxu0 0
      %917 = vmatprep.mubr.bf16.mxu0 0
      %918 = vmatmul.mubr.bf16.gmra.mrb[0].mxu0 %v870
      %v919 = vpop.f32.mrb[0].mxu0
      %v920 = vadd.f32 0.0, %v919
      %v921 = vpop.f32.mrb[0].mxu0
      %v922 = vpop.f32.mrb[0].mxu0
      %v923 = vadd.f32 0.0, %v922
      %v924 = vpop.f32.mrb[0].mxu0
      %925 = vmatprep.mubr.bf16.mxu0 0
      %926 = vmatmul.mubr.bf16.gmra.mrb[0].mxu0 %v873
      %v927 = vpop.f32.mrb[0].mxu0
      %v928 = vadd.f32 0.0, %v927
      %v929 = vpop.f32.mrb[0].mxu0
      %v930 = vpop.f32.mrb[0].mxu0
      %v931 = vadd.f32 0.0, %v930
      %v932 = vpop.f32.mrb[0].mxu0
      %933 = vmatprep.mubr.bf16.mxu0 0
      %934 = vmatmul.mubr.bf16.gmra.mrb[0].mxu0 %v876
      %v935 = vpop.f32.mrb[0].mxu0
      %v936 = vadd.f32 0.0, %v935
      %v937 = vpop.f32.mrb[0].mxu0
      %v938 = vpop.f32.mrb[0].mxu0
      %v939 = vadd.f32 0.0, %v938
      %v940 = vpop.f32.mrb[0].mxu0
      %941 = vmatprep.mubr.bf16.mxu0 0
      %942 = vmatmul.mubr.bf16.gmra.mrb[0].mxu0 %v879
      %v943 = vpop.f32.mrb[0].mxu0
      %v944 = vadd.f32 0.0, %v943
      %v945 = vpop.f32.mrb[0].mxu0
      %v946 = vpop.f32.mrb[0].mxu0
      %v947 = vadd.f32 0.0, %v946
      %v948 = vpop.f32.mrb[0].mxu0
      %949 = vdwg.mxu0
      %v950 = vld [vmem:[%s3] sm:$0xff]
      %vm951 = vcmask 64512
      %v953 = vsel %vm951, %v920, 0
      %v956 = vsel %vm951, %v923, 0
      %v959 = vsel %vm951, %v928, 0
      %v962 = vsel %vm951, %v931, 0
      %v965 = vsel %vm951, %v936, 0
      %v968 = vsel %vm951, %v939, 0
      %v971 = vsel %vm951, %v944, 0
      %v974 = vsel %vm951, %v947, 0
      %976 = vmatprep.subr.mxu0 0.0
      %977 = vmatpush1.msra.mxu0 %v950
      %978 = vmatprep.subr.mxu0 0.0
      %979 = vmatpush1.msra.mxu0 0.0
      %980 = vmatprep.subr.mxu0 0.0
      %981 = vmatpush1.msra.mxu0 0.0
      %982 = vmatprep.subr.mxu0 0.0
      %983 = vmatpush1.msra.mxu0 0.0
      %984 = vmatprep.subr.mxu0 0.0
      %985 = vmatpush1.msra.mxu0 0.0
      %986 = vmatprep.subr.mxu0 0.0
      %987 = vmatpush1.msra.mxu0 0.0
      %988 = vmatprep.subr.mxu0 0.0
      %989 = vmatpush1.msra.mxu0 0.0
      %990 = vmatprep.subr.mxu0 0.0
      %991 = vmatpush1.msra.mxu0 0.0
      %992 = vmatprep.subr.mxu0 0.0
      %993 = vmatpush1.msra.mxu0 0.0
      %994 = vmatprep.subr.mxu0 0.0
      %995 = vmatpush1.msra.mxu0 0.0
      %996 = vmatprep.subr.mxu0 0.0
      %997 = vmatpush1.msra.mxu0 0.0
      %998 = vmatprep.subr.mxu0 0.0
      %999 = vmatpush1.msra.mxu0 0.0
      %1000 = vmatprep.subr.mxu0 0.0
      %1001 = vmatpush1.msra.mxu0 0.0
      %1002 = vmatprep.subr.mxu0 0.0
      %1003 = vmatpush1.msra.mxu0 0.0
      %1004 = vmatprep.subr.mxu0 0.0
      %1005 = vmatpush1.msra.mxu0 0.0
      %1006 = vmatprep.subr.mxu0 0.0
      %1007 = vmatpush1.msra.mxu0 0.0
      %1008 = vmatprep.subr.mxu0 0.0
      %1009 = vmatpush1.msra.mxu0 0.0
      %1010 = vmatprep.subr.mxu0 0.0
      %1011 = vmatpush1.msra.mxu0 0.0
      %1012 = vmatprep.subr.mxu0 0.0
      %1013 = vmatpush1.msra.mxu0 0.0
      %1014 = vmatprep.subr.mxu0 0.0
      %1015 = vmatpush1.msra.mxu0 0.0
      %1016 = vmatprep.subr.mxu0 0.0
      %1017 = vmatpush1.msra.mxu0 0.0
      %1018 = vmatprep.subr.mxu0 0.0
      %1019 = vmatpush1.msra.mxu0 0.0
      %1020 = vmatprep.subr.mxu0 0.0
      %1021 = vmatpush1.msra.mxu0 0.0
      %1022 = vmatprep.subr.mxu0 0.0
      %1023 = vmatpush1.msra.mxu0 0.0
      %1024 = vmatprep.subr.mxu0 0.0
      %1025 = vmatpush1.msra.mxu0 0.0
      %1026 = vmatprep.subr.mxu0 0.0
      %1027 = vmatpush1.msra.mxu0 0.0
      %1028 = vmatprep.subr.mxu0 0.0
      %1029 = vmatpush1.msra.mxu0 0.0
      %1030 = vmatprep.subr.mxu0 0.0
      %1031 = vmatpush1.msra.mxu0 0.0
      %1032 = vmatprep.subr.mxu0 0.0
      %1033 = vmatpush1.msra.mxu0 0.0
      %1034 = vmatprep.subr.mxu0 0.0
      %1035 = vmatpush1.msra.mxu0 0.0
      %1036 = vmatprep.subr.mxu0 0.0
      %1037 = vmatpush1.msra.mxu0 0.0
      %1038 = vmatprep.subr.mxu0 0.0
      %1039 = vmatpush1.msra.mxu0 0.0
      %1040 = vmatprep.mubr.f32.mxu0 0.0
      %1041 = vmatmul.mubr.f32.gmra.mrb[0].mxu0 %v953
      %v1042 = vpop.f32.mrb[0].mxu0
      %v1043 = vadd.f32 0.0, %v1042
      %v1044 = vpop.f32.mrb[0].mxu0
      %1045 = vmatprep.mubr.f32.mxu0 0.0
      %1046 = vmatmul.mubr.f32.gmra.mrb[0].mxu0 %v956
      %v1047 = vpop.f32.mrb[0].mxu0
      %v1048 = vadd.f32 0.0, %v1047
      %v1049 = vpop.f32.mrb[0].mxu0
      %1050 = vmatprep.mubr.f32.mxu0 0.0
      %1051 = vmatmul.mubr.f32.gmra.mrb[0].mxu0 %v959
      %v1052 = vpop.f32.mrb[0].mxu0
      %v1053 = vadd.f32 0.0, %v1052
      %v1054 = vpop.f32.mrb[0].mxu0
      %1055 = vmatprep.mubr.f32.mxu0 0.0
      %1056 = vmatmul.mubr.f32.gmra.mrb[0].mxu0 %v962
      %v1057 = vpop.f32.mrb[0].mxu0
      %v1058 = vadd.f32 0.0, %v1057
      %v1059 = vpop.f32.mrb[0].mxu0
      %1060 = vmatprep.mubr.f32.mxu0 0.0
      %1061 = vmatmul.mubr.f32.gmra.mrb[0].mxu0 %v965
      %v1062 = vpop.f32.mrb[0].mxu0
      %v1063 = vadd.f32 0.0, %v1062
      %v1064 = vpop.f32.mrb[0].mxu0
      %1065 = vmatprep.mubr.f32.mxu0 0.0
      %1066 = vmatmul.mubr.f32.gmra.mrb[0].mxu0 %v968
      %v1067 = vpop.f32.mrb[0].mxu0
      %v1068 = vadd.f32 0.0, %v1067
      %v1069 = vpop.f32.mrb[0].mxu0
      %1070 = vmatprep.mubr.f32.mxu0 0.0
      %1071 = vmatmul.mubr.f32.gmra.mrb[0].mxu0 %v971
      %v1072 = vpop.f32.mrb[0].mxu0
      %v1073 = vadd.f32 0.0, %v1072
      %v1074 = vpop.f32.mrb[0].mxu0
      %1075 = vmatprep.mubr.f32.mxu0 0.0
      %1076 = vmatmul.mubr.f32.gmra.mrb[0].mxu0 %v974
      %v1077 = vpop.f32.mrb[0].mxu0
      %v1078 = vadd.f32 0.0, %v1077
      %v1079 = vpop.f32.mrb[0].mxu0
      %1080 = vdwg.mxu0
      %1089 = vrot.lane.b32.xlu0 %v1043, 127
      %v1090 = vpop.permute.xlu0 %1089
      %1091 = vrot.lane.b32.xlu0 %v1048, 127
      %v1092 = vpop.permute.xlu0 %1091
      %1093 = vrot.lane.b32.xlu0 %v1053, 127
      %v1094 = vpop.permute.xlu0 %1093
      %1095 = vrot.lane.b32.xlu0 %v1058, 127
      %v1096 = vpop.permute.xlu0 %1095
      %1097 = vrot.lane.b32.xlu0 %v1063, 127
      %v1098 = vpop.permute.xlu0 %1097
      %1099 = vrot.lane.b32.xlu0 %v1068, 127
      %v1100 = vpop.permute.xlu0 %1099
      %1101 = vrot.lane.b32.xlu0 %v1073, 127
      %v1102 = vpop.permute.xlu0 %1101
      %1103 = vrot.lane.b32.xlu0 %v1078, 127
      %v1104 = vpop.permute.xlu0 %1103
      %1113 = vxpose.xlu0.b32.start [1/16] %v1090, 128
      %1114 = vxpose.xlu0.b32.cont [2/16] %v1092, 128
      %1115 = vxpose.xlu0.b32.cont [3/16] 0.0, 128
      %1116 = vxpose.xlu0.b32.cont [4/16] 0.0, 128
      %1117 = vxpose.xlu0.b32.cont [5/16] 0.0, 128
      %1118 = vxpose.xlu0.b32.cont [6/16] 0.0, 128
      %1119 = vxpose.xlu0.b32.cont [7/16] 0.0, 128
      %1120 = vxpose.xlu0.b32.cont [8/16] 0.0, 128
      %1121 = vxpose.xlu0.b32.cont [9/16] 0.0, 128
      %1122 = vxpose.xlu0.b32.cont [10/16] 0.0, 128
      %1123 = vxpose.xlu0.b32.cont [11/16] 0.0, 128
      %1124 = vxpose.xlu0.b32.cont [12/16] 0.0, 128
      %1125 = vxpose.xlu0.b32.cont [13/16] 0.0, 128
      %1126 = vxpose.xlu0.b32.cont [14/16] 0.0, 128
      %1127 = vxpose.xlu0.b32.cont [15/16] 0.0, 128
      %1128 = vxpose.xlu0.b32.end [16/16] 0.0, 128
      %v1129 = vpop.trf.xlu0
      %v1130 = vpop.trf.xlu0
      %v1131 = vpop.trf.xlu0
      %v1132 = vpop.trf.xlu0
      %v1133 = vpop.trf.xlu0
      %v1134 = vpop.trf.xlu0
      %v1135 = vpop.trf.xlu0
      %v1136 = vpop.trf.xlu0
      %v1137 = vpop.trf.xlu0
      %v1138 = vpop.trf.xlu0
      %v1139 = vpop.trf.xlu0
      %v1140 = vpop.trf.xlu0
      %v1141 = vpop.trf.xlu0
      %v1142 = vpop.trf.xlu0
      %v1143 = vpop.trf.xlu0
      %v1144 = vpop.trf.xlu0
      %1145 = vxpose.xlu0.b32.start [1/16] %v1094, 128
      %1146 = vxpose.xlu0.b32.cont [2/16] %v1096, 128
      %1147 = vxpose.xlu0.b32.cont [3/16] 0.0, 128
      %1148 = vxpose.xlu0.b32.cont [4/16] 0.0, 128
      %1149 = vxpose.xlu0.b32.cont [5/16] 0.0, 128
      %1150 = vxpose.xlu0.b32.cont [6/16] 0.0, 128
      %1151 = vxpose.xlu0.b32.cont [7/16] 0.0, 128
      %1152 = vxpose.xlu0.b32.cont [8/16] 0.0, 128
      %1153 = vxpose.xlu0.b32.cont [9/16] 0.0, 128
      %1154 = vxpose.xlu0.b32.cont [10/16] 0.0, 128
      %1155 = vxpose.xlu0.b32.cont [11/16] 0.0, 128
      %1156 = vxpose.xlu0.b32.cont [12/16] 0.0, 128
      %1157 = vxpose.xlu0.b32.cont [13/16] 0.0, 128
      %1158 = vxpose.xlu0.b32.cont [14/16] 0.0, 128
      %1159 = vxpose.xlu0.b32.cont [15/16] 0.0, 128
      %1160 = vxpose.xlu0.b32.end [16/16] 0.0, 128
      %v1161 = vpop.trf.xlu0
      %v1162 = vpop.trf.xlu0
      %v1163 = vpop.trf.xlu0
      %v1164 = vpop.trf.xlu0
      %v1165 = vpop.trf.xlu0
      %v1166 = vpop.trf.xlu0
      %v1167 = vpop.trf.xlu0
      %v1168 = vpop.trf.xlu0
      %v1169 = vpop.trf.xlu0
      %v1170 = vpop.trf.xlu0
      %v1171 = vpop.trf.xlu0
      %v1172 = vpop.trf.xlu0
      %v1173 = vpop.trf.xlu0
      %v1174 = vpop.trf.xlu0
      %v1175 = vpop.trf.xlu0
      %v1176 = vpop.trf.xlu0
      %1177 = vxpose.xlu0.b32.start [1/16] %v1098, 128
      %1178 = vxpose.xlu0.b32.cont [2/16] %v1100, 128
      %1179 = vxpose.xlu0.b32.cont [3/16] 0.0, 128
      %1180 = vxpose.xlu0.b32.cont [4/16] 0.0, 128
      %1181 = vxpose.xlu0.b32.cont [5/16] 0.0, 128
      %1182 = vxpose.xlu0.b32.cont [6/16] 0.0, 128
      %1183 = vxpose.xlu0.b32.cont [7/16] 0.0, 128
      %1184 = vxpose.xlu0.b32.cont [8/16] 0.0, 128
      %1185 = vxpose.xlu0.b32.cont [9/16] 0.0, 128
      %1186 = vxpose.xlu0.b32.cont [10/16] 0.0, 128
      %1187 = vxpose.xlu0.b32.cont [11/16] 0.0, 128
      %1188 = vxpose.xlu0.b32.cont [12/16] 0.0, 128
      %1189 = vxpose.xlu0.b32.cont [13/16] 0.0, 128
      %1190 = vxpose.xlu0.b32.cont [14/16] 0.0, 128
      %1191 = vxpose.xlu0.b32.cont [15/16] 0.0, 128
      %1192 = vxpose.xlu0.b32.end [16/16] 0.0, 128
      %v1193 = vpop.trf.xlu0
      %v1194 = vpop.trf.xlu0
      %v1195 = vpop.trf.xlu0
      %v1196 = vpop.trf.xlu0
      %v1197 = vpop.trf.xlu0
      %v1198 = vpop.trf.xlu0
      %v1199 = vpop.trf.xlu0
      %v1200 = vpop.trf.xlu0
      %v1201 = vpop.trf.xlu0
      %v1202 = vpop.trf.xlu0
      %v1203 = vpop.trf.xlu0
      %v1204 = vpop.trf.xlu0
      %v1205 = vpop.trf.xlu0
      %v1206 = vpop.trf.xlu0
      %v1207 = vpop.trf.xlu0
      %v1208 = vpop.trf.xlu0
      %1209 = vxpose.xlu0.b32.start [1/16] %v1102, 128
      %1210 = vxpose.xlu0.b32.cont [2/16] %v1104, 128
      %1211 = vxpose.xlu0.b32.cont [3/16] 0.0, 128
      %1212 = vxpose.xlu0.b32.cont [4/16] 0.0, 128
      %1213 = vxpose.xlu0.b32.cont [5/16] 0.0, 128
      %1214 = vxpose.xlu0.b32.cont [6/16] 0.0, 128
      %1215 = vxpose.xlu0.b32.cont [7/16] 0.0, 128
      %1216 = vxpose.xlu0.b32.cont [8/16] 0.0, 128
      %1217 = vxpose.xlu0.b32.cont [9/16] 0.0, 128
      %1218 = vxpose.xlu0.b32.cont [10/16] 0.0, 128
      %1219 = vxpose.xlu0.b32.cont [11/16] 0.0, 128
      %1220 = vxpose.xlu0.b32.cont [12/16] 0.0, 128
      %1221 = vxpose.xlu0.b32.cont [13/16] 0.0, 128
      %1222 = vxpose.xlu0.b32.cont [14/16] 0.0, 128
      %1223 = vxpose.xlu0.b32.cont [15/16] 0.0, 128
      %1224 = vxpose.xlu0.b32.end [16/16] 0.0, 128
      %v1225 = vpop.trf.xlu0
      %v1226 = vpop.trf.xlu0
      %v1227 = vpop.trf.xlu0
      %v1228 = vpop.trf.xlu0
      %v1229 = vpop.trf.xlu0
      %v1230 = vpop.trf.xlu0
      %v1231 = vpop.trf.xlu0
      %v1232 = vpop.trf.xlu0
      %v1233 = vpop.trf.xlu0
      %v1234 = vpop.trf.xlu0
      %v1235 = vpop.trf.xlu0
      %v1236 = vpop.trf.xlu0
      %v1237 = vpop.trf.xlu0
      %v1238 = vpop.trf.xlu0
      %v1239 = vpop.trf.xlu0
      %v1240 = vpop.trf.xlu0
      %1241 = vset.pattern.permute.xlu0 0
      %1242 = vperm.xlu0 %1241, %v1043
      %v1243 = vpop.permute.xlu0 %1242
      %1245 = vset.pattern.permute.xlu0 0
      %1246 = vperm.xlu0 %1245, %v1048
      %v1247 = vpop.permute.xlu0 %1246
      %1249 = vset.pattern.permute.xlu0 0
      %1250 = vperm.xlu0 %1249, %v1053
      %v1251 = vpop.permute.xlu0 %1250
      %1253 = vset.pattern.permute.xlu0 0
      %1254 = vperm.xlu0 %1253, %v1058
      %v1255 = vpop.permute.xlu0 %1254
      %1257 = vset.pattern.permute.xlu0 0
      %1258 = vperm.xlu0 %1257, %v1063
      %v1259 = vpop.permute.xlu0 %1258
      %1261 = vset.pattern.permute.xlu0 0
      %1262 = vperm.xlu0 %1261, %v1068
      %v1263 = vpop.permute.xlu0 %1262
      %1265 = vset.pattern.permute.xlu0 0
      %1266 = vperm.xlu0 %1265, %v1073
      %v1267 = vpop.permute.xlu0 %1266
      %1269 = vset.pattern.permute.xlu0 0
      %1270 = vperm.xlu0 %1269, %v1078
      %v1271 = vpop.permute.xlu0 %1270
      %v1273 = vlaneseq
      %v1274 = vshrl.u32 %v1273, 7
      %v1275 = vsub.s32 0, %v1274
      %v1276 = vrot.slane %v1129, %v1275
      %v1277 = vlaneseq
      %v1278 = vshrl.u32 %v1277, 7
      %v1279 = vsub.s32 0, %v1278
      %v1280 = vrot.slane %v1161, %v1279
      %v1281 = vlaneseq
      %v1282 = vshrl.u32 %v1281, 7
      %v1283 = vsub.s32 0, %v1282
      %v1284 = vrot.slane %v1193, %v1283
      %v1285 = vlaneseq
      %v1286 = vshrl.u32 %v1285, 7
      %v1287 = vsub.s32 0, %v1286
      %v1288 = vrot.slane %v1225, %v1287
      %v1289 = vadd.f32 %v1243, %v1276
      %v1290 = vadd.f32 %v1247, %v1276
      %v1291 = vadd.f32 %v1251, %v1280
      %v1292 = vadd.f32 %v1255, %v1280
      %v1293 = vadd.f32 %v1259, %v1284
      %v1294 = vadd.f32 %v1263, %v1284
      %v1295 = vadd.f32 %v1267, %v1288
      %v1296 = vadd.f32 %v1271, %v1288
      %vm1297 = vcmp.gt.f32.partialorder %v1289, 0.0
      %vm1298 = vcmp.gt.f32.partialorder %v1290, 0.0
      %vm1299 = vcmp.gt.f32.partialorder %v1291, 0.0
      %vm1300 = vcmp.gt.f32.partialorder %v1292, 0.0
      %vm1301 = vcmp.gt.f32.partialorder %v1293, 0.0
      %vm1302 = vcmp.gt.f32.partialorder %v1294, 0.0
      %vm1303 = vcmp.gt.f32.partialorder %v1295, 0.0
      %vm1304 = vcmp.gt.f32.partialorder %v1296, 0.0
      %v1305 = vmul.f32 %v1289, 0.2
      %v1306 = vmul.f32 %v1290, 0.2
      %v1307 = vmul.f32 %v1291, 0.2
      %v1308 = vmul.f32 %v1292, 0.2
      %v1309 = vmul.f32 %v1293, 0.2
      %v1310 = vmul.f32 %v1294, 0.2
      %v1311 = vmul.f32 %v1295, 0.2
      %v1312 = vmul.f32 %v1296, 0.2
      %v1313 = vsel %vm1297, %v1289, %v1305
      %v1314 = vsel %vm1298, %v1290, %v1306
      %v1315 = vsel %vm1299, %v1291, %v1307
      %v1316 = vsel %vm1300, %v1292, %v1308
      %v1317 = vsel %vm1301, %v1293, %v1309
      %v1318 = vsel %vm1302, %v1294, %v1310
      %v1319 = vsel %vm1303, %v1295, %v1311
      %v1320 = vsel %vm1304, %v1296, %v1312
      %v1321 = vld [vmem:[%s1] sm:$0xff]
      %v1322 = vld [vmem:[%s1 + $0x8] sm:$0xff]
      %v1323 = vadd.f32 %v1313, %v1321
      %v1324 = vadd.f32 %v1314, %v1322
      %v1325 = vadd.f32 %v1315, %v1321
      %v1326 = vadd.f32 %v1316, %v1322
      %v1327 = vadd.f32 %v1317, %v1321
      %v1328 = vadd.f32 %v1318, %v1322
      %v1329 = vadd.f32 %v1319, %v1321
      %v1330 = vadd.f32 %v1320, %v1322
      %vm1331 = vcmask 130048
      %v1332 = vsel %vm1331, %v1323, -inf
      %1333 = vmax.xlane.f32.xlu0 %v1332
      %v1334 = vpop.xlane.xlu0 %1333
      %v1335 = vsel %vm1331, %v1324, -inf
      %1336 = vmax.xlane.f32.xlu0 %v1335
      %v1337 = vpop.xlane.xlu0 %1336
      %v1338 = vsel %vm1331, %v1325, -inf
      %1339 = vmax.xlane.f32.xlu0 %v1338
      %v1340 = vpop.xlane.xlu0 %1339
      %v1341 = vsel %vm1331, %v1326, -inf
      %1342 = vmax.xlane.f32.xlu0 %v1341
      %v1343 = vpop.xlane.xlu0 %1342
      %v1344 = vsel %vm1331, %v1327, -inf
      %1345 = vmax.xlane.f32.xlu0 %v1344
      %v1346 = vpop.xlane.xlu0 %1345
      %v1347 = vsel %vm1331, %v1328, -inf
      %1348 = vmax.xlane.f32.xlu0 %v1347
      %v1349 = vpop.xlane.xlu0 %1348
      %v1350 = vsel %vm1331, %v1329, -inf
      %1351 = vmax.xlane.f32.xlu0 %v1350
      %v1352 = vpop.xlane.xlu0 %1351
      %v1353 = vsel %vm1331, %v1330, -inf
      %1354 = vmax.xlane.f32.xlu0 %v1353
      %v1355 = vpop.xlane.xlu0 %1354
      %v1356 = vsub.f32 %v1323, %v1334
      %v1357 = vsub.f32 %v1324, %v1337
      %v1358 = vsub.f32 %v1325, %v1340
      %v1359 = vsub.f32 %v1326, %v1343
      %v1360 = vsub.f32 %v1327, %v1346
      %v1361 = vsub.f32 %v1328, %v1349
      %v1362 = vsub.f32 %v1329, %v1352
      %v1363 = vsub.f32 %v1330, %v1355
      %v1364 = vmul.f32 %v1356, 1.442695
      %v1365 = vpow.pop %v1364
      %v1366 = vmul.f32 %v1357, 1.442695
      %v1367 = vpow.pop %v1366
      %v1368 = vmul.f32 %v1358, 1.442695
      %v1369 = vpow.pop %v1368
      %v1370 = vmul.f32 %v1359, 1.442695
      %v1371 = vpow.pop %v1370
      %v1372 = vmul.f32 %v1360, 1.442695
      %v1373 = vpow.pop %v1372
      %v1374 = vmul.f32 %v1361, 1.442695
      %v1375 = vpow.pop %v1374
      %v1376 = vmul.f32 %v1362, 1.442695
      %v1377 = vpow.pop %v1376
      %v1378 = vmul.f32 %v1363, 1.442695
      %v1379 = vpow.pop %v1378
      %v1380 = vsel %vm1331, %v1365, 0.0
      %1381 = vadd.xlane.f32.xlu0 %v1380
      %v1382 = vpop.xlane.xlu0 %1381
      %v1383 = vsel %vm1331, %v1367, 0.0
      %1384 = vadd.xlane.f32.xlu0 %v1383
      %v1385 = vpop.xlane.xlu0 %1384
      %v1386 = vsel %vm1331, %v1369, 0.0
      %1387 = vadd.xlane.f32.xlu0 %v1386
      %v1388 = vpop.xlane.xlu0 %1387
      %v1389 = vsel %vm1331, %v1371, 0.0
      %1390 = vadd.xlane.f32.xlu0 %v1389
      %v1391 = vpop.xlane.xlu0 %1390
      %v1392 = vsel %vm1331, %v1373, 0.0
      %1393 = vadd.xlane.f32.xlu0 %v1392
      %v1394 = vpop.xlane.xlu0 %1393
      %v1395 = vsel %vm1331, %v1375, 0.0
      %1396 = vadd.xlane.f32.xlu0 %v1395
      %v1397 = vpop.xlane.xlu0 %1396
      %v1398 = vsel %vm1331, %v1377, 0.0
      %1399 = vadd.xlane.f32.xlu0 %v1398
      %v1400 = vpop.xlane.xlu0 %1399
      %v1401 = vsel %vm1331, %v1379, 0.0
      %1402 = vadd.xlane.f32.xlu0 %v1401
      %v1403 = vpop.xlane.xlu0 %1402
      %v1404 = vrcp.pop %v1382
      %v1405 = vrcp.pop %v1385
      %v1406 = vrcp.pop %v1388
      %v1407 = vrcp.pop %v1391
      %v1408 = vrcp.pop %v1394
      %v1409 = vrcp.pop %v1397
      %v1410 = vrcp.pop %v1400
      %v1411 = vrcp.pop %v1403
      %v1412 = vmul.f32 %v1365, %v1404
      %v1413 = vmul.f32 %v1367, %v1405
      %v1414 = vmul.f32 %v1369, %v1406
      %v1415 = vmul.f32 %v1371, %v1407
      %v1416 = vmul.f32 %v1373, %v1408
      %v1417 = vmul.f32 %v1375, %v1409
      %v1418 = vmul.f32 %v1377, %v1410
      %v1419 = vmul.f32 %v1379, %v1411
      %v1420 = vpack.c.bf16 %v1413, %v1412
      %v1421 = vpack.c.bf16 %v1415, %v1414
      %v1422 = vpack.c.bf16 %v1417, %v1416
      %v1423 = vpack.c.bf16 %v1419, %v1418
      %v1424 = vpack.c.bf16 %v923, %v920
      %v1425 = vpack.c.bf16 %v931, %v928
      %v1426 = vpack.c.bf16 %v939, %v936
      %v1427 = vpack.c.bf16 %v947, %v944
      %v1429 = vsel %vm1331, %v1420, 0
      %1431 = vmatprep.subr.bf16.mxu0 0
      %1432 = vmatpush1.bf16.msra.mxu0 %v1424
      %1433 = vmatprep.subr.bf16.mxu0 0
      %1434 = vmatpush1.bf16.msra.mxu0 0
      %1435 = vmatprep.subr.bf16.mxu0 0
      %1436 = vmatpush1.bf16.msra.mxu0 0
      %1437 = vmatprep.subr.bf16.mxu0 0
      %1438 = vmatpush1.bf16.msra.mxu0 0
      %1439 = vmatprep.subr.bf16.mxu0 0
      %1440 = vmatpush1.bf16.msra.mxu0 0
      %1441 = vmatprep.subr.bf16.mxu0 0
      %1442 = vmatpush1.bf16.msra.mxu0 0
      %1443 = vmatprep.subr.bf16.mxu0 0
      %1444 = vmatpush1.bf16.msra.mxu0 0
      %1445 = vmatprep.subr.bf16.mxu0 0
      %1446 = vmatpush1.bf16.msra.mxu0 0
      %1447 = vmatprep.subr.bf16.mxu0 0
      %1448 = vmatpush1.bf16.msra.mxu0 0
      %1449 = vmatprep.subr.bf16.mxu0 0
      %1450 = vmatpush1.bf16.msra.mxu0 0
      %1451 = vmatprep.subr.bf16.mxu0 0
      %1452 = vmatpush1.bf16.msra.mxu0 0
      %1453 = vmatprep.subr.bf16.mxu0 0
      %1454 = vmatpush1.bf16.msra.mxu0 0
      %1455 = vmatprep.subr.bf16.mxu0 0
      %1456 = vmatpush1.bf16.msra.mxu0 0
      %1457 = vmatprep.subr.bf16.mxu0 0
      %1458 = vmatpush1.bf16.msra.mxu0 0
      %1459 = vmatprep.subr.bf16.mxu0 0
      %1460 = vmatpush1.bf16.msra.mxu0 0
      %1461 = vmatprep.subr.bf16.mxu0 0
      %1462 = vmatpush1.bf16.msra.mxu0 0
      %1463 = vmatprep.mubr.bf16.mxu0 0
      %1464 = vmatmul.mubr.bf16.gmra.mrb[0].mxu0 %v1429
      %v1465 = vpop.f32.mrb[0].mxu0
      %v1466 = vadd.f32 0.0, %v1465
      %v1467 = vpop.f32.mrb[0].mxu0
      %v1468 = vpop.f32.mrb[0].mxu0
      %v1469 = vadd.f32 0.0, %v1468
      %v1470 = vpop.f32.mrb[0].mxu0
      %1471 = vdwg.mxu0
      %v1473 = vsel %vm1331, %v1421, 0
      %1475 = vmatprep.subr.bf16.mxu0 0
      %1476 = vmatpush1.bf16.msra.mxu0 %v1425
      %1477 = vmatprep.subr.bf16.mxu0 0
      %1478 = vmatpush1.bf16.msra.mxu0 0
      %1479 = vmatprep.subr.bf16.mxu0 0
      %1480 = vmatpush1.bf16.msra.mxu0 0
      %1481 = vmatprep.subr.bf16.mxu0 0
      %1482 = vmatpush1.bf16.msra.mxu0 0
      %1483 = vmatprep.subr.bf16.mxu0 0
      %1484 = vmatpush1.bf16.msra.mxu0 0
      %1485 = vmatprep.subr.bf16.mxu0 0
      %1486 = vmatpush1.bf16.msra.mxu0 0
      %1487 = vmatprep.subr.bf16.mxu0 0
      %1488 = vmatpush1.bf16.msra.mxu0 0
      %1489 = vmatprep.subr.bf16.mxu0 0
      %1490 = vmatpush1.bf16.msra.mxu0 0
      %1491 = vmatprep.subr.bf16.mxu0 0
      %1492 = vmatpush1.bf16.msra.mxu0 0
      %1493 = vmatprep.subr.bf16.mxu0 0
      %1494 = vmatpush1.bf16.msra.mxu0 0
      %1495 = vmatprep.subr.bf16.mxu0 0
      %1496 = vmatpush1.bf16.msra.mxu0 0
      %1497 = vmatprep.subr.bf16.mxu0 0
      %1498 = vmatpush1.bf16.msra.mxu0 0
      %1499 = vmatprep.subr.bf16.mxu0 0
      %1500 = vmatpush1.bf16.msra.mxu0 0
      %1501 = vmatprep.subr.bf16.mxu0 0
      %1502 = vmatpush1.bf16.msra.mxu0 0
      %1503 = vmatprep.subr.bf16.mxu0 0
      %1504 = vmatpush1.bf16.msra.mxu0 0
      %1505 = vmatprep.subr.bf16.mxu0 0
      %1506 = vmatpush1.bf16.msra.mxu0 0
      %1507 = vmatprep.mubr.bf16.mxu0 0
      %1508 = vmatmul.mubr.bf16.gmra.mrb[0].mxu0 %v1473
      %v1509 = vpop.f32.mrb[0].mxu0
      %v1510 = vadd.f32 0.0, %v1509
      %v1511 = vpop.f32.mrb[0].mxu0
      %v1512 = vpop.f32.mrb[0].mxu0
      %v1513 = vadd.f32 0.0, %v1512
      %v1514 = vpop.f32.mrb[0].mxu0
      %1515 = vdwg.mxu0
      %v1517 = vsel %vm1331, %v1422, 0
      %1519 = vmatprep.subr.bf16.mxu0 0
      %1520 = vmatpush1.bf16.msra.mxu0 %v1426
      %1521 = vmatprep.subr.bf16.mxu0 0
      %1522 = vmatpush1.bf16.msra.mxu0 0
      %1523 = vmatprep.subr.bf16.mxu0 0
      %1524 = vmatpush1.bf16.msra.mxu0 0
      %1525 = vmatprep.subr.bf16.mxu0 0
      %1526 = vmatpush1.bf16.msra.mxu0 0
      %1527 = vmatprep.subr.bf16.mxu0 0
      %1528 = vmatpush1.bf16.msra.mxu0 0
      %1529 = vmatprep.subr.bf16.mxu0 0
      %1530 = vmatpush1.bf16.msra.mxu0 0
      %1531 = vmatprep.subr.bf16.mxu0 0
      %1532 = vmatpush1.bf16.msra.mxu0 0
      %1533 = vmatprep.subr.bf16.mxu0 0
      %1534 = vmatpush1.bf16.msra.mxu0 0
      %1535 = vmatprep.subr.bf16.mxu0 0
      %1536 = vmatpush1.bf16.msra.mxu0 0
      %1537 = vmatprep.subr.bf16.mxu0 0
      %1538 = vmatpush1.bf16.msra.mxu0 0
      %1539 = vmatprep.subr.bf16.mxu0 0
      %1540 = vmatpush1.bf16.msra.mxu0 0
      %1541 = vmatprep.subr.bf16.mxu0 0
      %1542 = vmatpush1.bf16.msra.mxu0 0
      %1543 = vmatprep.subr.bf16.mxu0 0
      %1544 = vmatpush1.bf16.msra.mxu0 0
      %1545 = vmatprep.subr.bf16.mxu0 0
      %1546 = vmatpush1.bf16.msra.mxu0 0
      %1547 = vmatprep.subr.bf16.mxu0 0
      %1548 = vmatpush1.bf16.msra.mxu0 0
      %1549 = vmatprep.subr.bf16.mxu0 0
      %1550 = vmatpush1.bf16.msra.mxu0 0
      %1551 = vmatprep.mubr.bf16.mxu0 0
      %1552 = vmatmul.mubr.bf16.gmra.mrb[0].mxu0 %v1517
      %v1553 = vpop.f32.mrb[0].mxu0
      %v1554 = vadd.f32 0.0, %v1553
      %v1555 = vpop.f32.mrb[0].mxu0
      %v1556 = vpop.f32.mrb[0].mxu0
      %v1557 = vadd.f32 0.0, %v1556
      %v1558 = vpop.f32.mrb[0].mxu0
      %1559 = vdwg.mxu0
      %v1561 = vsel %vm1331, %v1423, 0
      %1563 = vmatprep.subr.bf16.mxu0 0
      %1564 = vmatpush1.bf16.msra.mxu0 %v1427
      %1565 = vmatprep.subr.bf16.mxu0 0
      %1566 = vmatpush1.bf16.msra.mxu0 0
      %1567 = vmatprep.subr.bf16.mxu0 0
      %1568 = vmatpush1.bf16.msra.mxu0 0
      %1569 = vmatprep.subr.bf16.mxu0 0
      %1570 = vmatpush1.bf16.msra.mxu0 0
      %1571 = vmatprep.subr.bf16.mxu0 0
      %1572 = vmatpush1.bf16.msra.mxu0 0
      %1573 = vmatprep.subr.bf16.mxu0 0
      %1574 = vmatpush1.bf16.msra.mxu0 0
      %1575 = vmatprep.subr.bf16.mxu0 0
      %1576 = vmatpush1.bf16.msra.mxu0 0
      %1577 = vmatprep.subr.bf16.mxu0 0
      %1578 = vmatpush1.bf16.msra.mxu0 0
      %1579 = vmatprep.subr.bf16.mxu0 0
      %1580 = vmatpush1.bf16.msra.mxu0 0
      %1581 = vmatprep.subr.bf16.mxu0 0
      %1582 = vmatpush1.bf16.msra.mxu0 0
      %1583 = vmatprep.subr.bf16.mxu0 0
      %1584 = vmatpush1.bf16.msra.mxu0 0
      %1585 = vmatprep.subr.bf16.mxu0 0
      %1586 = vmatpush1.bf16.msra.mxu0 0
      %1587 = vmatprep.subr.bf16.mxu0 0
      %1588 = vmatpush1.bf16.msra.mxu0 0
      %1589 = vmatprep.subr.bf16.mxu0 0
      %1590 = vmatpush1.bf16.msra.mxu0 0
      %1591 = vmatprep.subr.bf16.mxu0 0
      %1592 = vmatpush1.bf16.msra.mxu0 0
      %1593 = vmatprep.subr.bf16.mxu0 0
      %1594 = vmatpush1.bf16.msra.mxu0 0
      %1595 = vmatprep.mubr.bf16.mxu0 0
      %1596 = vmatmul.mubr.bf16.gmra.mrb[0].mxu0 %v1561
      %v1597 = vpop.f32.mrb[0].mxu0
      %v1598 = vadd.f32 0.0, %v1597
      %v1599 = vpop.f32.mrb[0].mxu0
      %v1600 = vpop.f32.mrb[0].mxu0
      %v1601 = vadd.f32 0.0, %v1600
      %v1602 = vpop.f32.mrb[0].mxu0
      %1603 = vdwg.mxu0
      %vm1604 = vcmp.gt.f32.partialorder %v1466, 0.0
      %vm1605 = vcmp.gt.f32.partialorder %v1469, 0.0
      %vm1606 = vcmp.gt.f32.partialorder %v1510, 0.0
      %vm1607 = vcmp.gt.f32.partialorder %v1513, 0.0
      %vm1608 = vcmp.gt.f32.partialorder %v1554, 0.0
      %vm1609 = vcmp.gt.f32.partialorder %v1557, 0.0
      %vm1610 = vcmp.gt.f32.partialorder %v1598, 0.0
      %vm1611 = vcmp.gt.f32.partialorder %v1601, 0.0
      %v1612 = vmin.f32 %v1466, 0.0
      %v1613 = vmin.f32 %v1469, 0.0
      %v1614 = vmin.f32 %v1510, 0.0
      %v1615 = vmin.f32 %v1513, 0.0
      %v1616 = vmin.f32 %v1554, 0.0
      %v1617 = vmin.f32 %v1557, 0.0
      %v1618 = vmin.f32 %v1598, 0.0
      %v1619 = vmin.f32 %v1601, 0.0
      %v1620 = vmul.f32 %v1612, 1.442695
      %v1621 = vpow.pop %v1620
      %v1622 = vmul.f32 %v1613, 1.442695
      %v1623 = vpow.pop %v1622
      %v1624 = vmul.f32 %v1614, 1.442695
      %v1625 = vpow.pop %v1624
      %v1626 = vmul.f32 %v1615, 1.442695
      %v1627 = vpow.pop %v1626
      %v1628 = vmul.f32 %v1616, 1.442695
      %v1629 = vpow.pop %v1628
      %v1630 = vmul.f32 %v1617, 1.442695
      %v1631 = vpow.pop %v1630
      %v1632 = vmul.f32 %v1618, 1.442695
      %v1633 = vpow.pop %v1632
      %v1634 = vmul.f32 %v1619, 1.442695
      %v1635 = vpow.pop %v1634
      %v1636 = vsub.f32 %v1621, 1.0
      %v1637 = vsub.f32 %v1623, 1.0
      %v1638 = vsub.f32 %v1625, 1.0
      %v1639 = vsub.f32 %v1627, 1.0
      %v1640 = vsub.f32 %v1629, 1.0
      %v1641 = vsub.f32 %v1631, 1.0
      %v1642 = vsub.f32 %v1633, 1.0
      %v1643 = vsub.f32 %v1635, 1.0
      %v1644 = vsel %vm1604, %v1466, %v1636
      %v1645 = vsel %vm1605, %v1469, %v1637
      %v1646 = vsel %vm1606, %v1510, %v1638
      %v1647 = vsel %vm1607, %v1513, %v1639
      %v1648 = vsel %vm1608, %v1554, %v1640
      %v1649 = vsel %vm1609, %v1557, %v1641
      %v1650 = vsel %vm1610, %v1598, %v1642
      %v1651 = vsel %vm1611, %v1601, %v1643
      %v1652 = vcombine.low %v1644, %v1648
      %v1653 = vcombine.high %v1644, %v1648
      %v1655 = vunpack.c.l.s4 1983009808
      %v1656 = vunpack.c.0.s8 %v1655
      %v1657 = vlaneseq
      %v1658 = vshrl.u32 %v1657, 7
      %v1659 = vsub.s32 %v1656, %v1658
      %v1660 = vrot.slane %v1652, %v1659
      %v1662 = vunpack.c.l.s4 1983009808
      %v1663 = vunpack.c.0.s8 %v1662
      %v1664 = vlaneseq
      %v1665 = vshrl.u32 %v1664, 7
      %v1666 = vsub.s32 %v1663, %v1665
      %v1667 = vrot.slane %v1653, %v1666
      %v1668 = vcombine.low %v1646, %v1650
      %v1669 = vcombine.high %v1646, %v1650
      %v1671 = vunpack.c.l.s4 1983009808
      %v1672 = vunpack.c.0.s8 %v1671
      %v1673 = vlaneseq
      %v1674 = vshrl.u32 %v1673, 7
      %v1675 = vsub.s32 %v1672, %v1674
      %v1676 = vrot.slane %v1668, %v1675
      %v1678 = vunpack.c.l.s4 1983009808
      %v1679 = vunpack.c.0.s8 %v1678
      %v1680 = vlaneseq
      %v1681 = vshrl.u32 %v1680, 7
      %v1682 = vsub.s32 %v1679, %v1681
      %v1683 = vrot.slane %v1669, %v1682
      %v1684 = vcombine.low %v1660, %v1676
      %v1685 = vcombine.high %v1660, %v1676
      %v1687 = vunpack.c.l.s4 1934713408
      %v1688 = vunpack.c.0.s8 %v1687
      %v1689 = vlaneseq
      %v1690 = vshrl.u32 %v1689, 7
      %v1691 = vsub.s32 %v1688, %v1690
      %v1692 = vrot.slane %v1684, %v1691
      %v1694 = vunpack.c.l.s4 1934713408
      %v1695 = vunpack.c.0.s8 %v1694
      %v1696 = vlaneseq
      %v1697 = vshrl.u32 %v1696, 7
      %v1698 = vsub.s32 %v1695, %v1697
      %v1699 = vrot.slane %v1685, %v1698
      %v1700 = vcombine.low %v1667, %v1683
      %v1701 = vcombine.high %v1667, %v1683
      %v1703 = vunpack.c.l.s4 1934713408
      %v1704 = vunpack.c.0.s8 %v1703
      %v1705 = vlaneseq
      %v1706 = vshrl.u32 %v1705, 7
      %v1707 = vsub.s32 %v1704, %v1706
      %v1708 = vrot.slane %v1700, %v1707
      %v1710 = vunpack.c.l.s4 1934713408
      %v1711 = vunpack.c.0.s8 %v1710
      %v1712 = vlaneseq
      %v1713 = vshrl.u32 %v1712, 7
      %v1714 = vsub.s32 %v1711, %v1713
      %v1715 = vrot.slane %v1701, %v1714
      %v1716 = vcombine.high %v1692, 0.0
      %v1717 = vcombine.high %v1699, 0.0
      %v1718 = vcombine.high %v1708, 0.0
      %v1719 = vcombine.high %v1715, 0.0
      %v1720 = vcombine.low %v1645, %v1649
      %v1721 = vcombine.high %v1645, %v1649
      %v1723 = vunpack.c.l.s4 1983009808
      %v1724 = vunpack.c.0.s8 %v1723
      %v1725 = vlaneseq
      %v1726 = vshrl.u32 %v1725, 7
      %v1727 = vsub.s32 %v1724, %v1726
      %v1728 = vrot.slane %v1720, %v1727
      %v1730 = vunpack.c.l.s4 1983009808
      %v1731 = vunpack.c.0.s8 %v1730
      %v1732 = vlaneseq
      %v1733 = vshrl.u32 %v1732, 7
      %v1734 = vsub.s32 %v1731, %v1733
      %v1735 = vrot.slane %v1721, %v1734
      %v1736 = vcombine.low %v1647, %v1651
      %v1737 = vcombine.high %v1647, %v1651
      %v1739 = vunpack.c.l.s4 1983009808
      %v1740 = vunpack.c.0.s8 %v1739
      %v1741 = vlaneseq
      %v1742 = vshrl.u32 %v1741, 7
      %v1743 = vsub.s32 %v1740, %v1742
      %v1744 = vrot.slane %v1736, %v1743
      %v1746 = vunpack.c.l.s4 1983009808
      %v1747 = vunpack.c.0.s8 %v1746
      %v1748 = vlaneseq
      %v1749 = vshrl.u32 %v1748, 7
      %v1750 = vsub.s32 %v1747, %v1749
      %v1751 = vrot.slane %v1737, %v1750
      %v1752 = vcombine.low %v1728, %v1744
      %v1753 = vcombine.high %v1728, %v1744
      %v1755 = vunpack.c.l.s4 1934713408
      %v1756 = vunpack.c.0.s8 %v1755
      %v1757 = vlaneseq
      %v1758 = vshrl.u32 %v1757, 7
      %v1759 = vsub.s32 %v1756, %v1758
      %v1760 = vrot.slane %v1752, %v1759
      %v1762 = vunpack.c.l.s4 1934713408
      %v1763 = vunpack.c.0.s8 %v1762
      %v1764 = vlaneseq
      %v1765 = vshrl.u32 %v1764, 7
      %v1766 = vsub.s32 %v1763, %v1765
      %v1767 = vrot.slane %v1753, %v1766
      %v1768 = vcombine.low %v1735, %v1751
      %v1769 = vcombine.high %v1735, %v1751
      %v1771 = vunpack.c.l.s4 1934713408
      %v1772 = vunpack.c.0.s8 %v1771
      %v1773 = vlaneseq
      %v1774 = vshrl.u32 %v1773, 7
      %v1775 = vsub.s32 %v1772, %v1774
      %v1776 = vrot.slane %v1768, %v1775
      %v1778 = vunpack.c.l.s4 1934713408
      %v1779 = vunpack.c.0.s8 %v1778
      %v1780 = vlaneseq
      %v1781 = vshrl.u32 %v1780, 7
      %v1782 = vsub.s32 %v1779, %v1781
      %v1783 = vrot.slane %v1769, %v1782
      %v1784 = vcombine.high %v1760, 0.0
      %v1785 = vcombine.high %v1767, 0.0
      %v1786 = vcombine.high %v1776, 0.0
      %v1787 = vcombine.high %v1783, 0.0
      %1788 = vxpose.xlu0.b32.start [1/16] %v1692, 128
      %1789 = vxpose.xlu0.b32.cont [2/16] 0.0, 128
      %1790 = vxpose.xlu0.b32.cont [3/16] 0.0, 128
      %1791 = vxpose.xlu0.b32.cont [4/16] 0.0, 128
      %1792 = vxpose.xlu0.b32.cont [5/16] 0.0, 128
      %1793 = vxpose.xlu0.b32.cont [6/16] 0.0, 128
      %1794 = vxpose.xlu0.b32.cont [7/16] 0.0, 128
      %1795 = vxpose.xlu0.b32.cont [8/16] 0.0, 128
      %1796 = vxpose.xlu0.b32.cont [9/16] 0.0, 128
      %1797 = vxpose.xlu0.b32.cont [10/16] 0.0, 128
      %1798 = vxpose.xlu0.b32.cont [11/16] 0.0, 128
      %1799 = vxpose.xlu0.b32.cont [12/16] 0.0, 128
      %1800 = vxpose.xlu0.b32.cont [13/16] 0.0, 128
      %1801 = vxpose.xlu0.b32.cont [14/16] 0.0, 128
      %1802 = vxpose.xlu0.b32.cont [15/16] 0.0, 128
      %1803 = vxpose.xlu0.b32.end [16/16] 0.0, 128
      %v1804 = vpop.trf.xlu0
      %v1805 = vpop.trf.xlu0
      %v1806 = vpop.trf.xlu0
      %v1807 = vpop.trf.xlu0
      %v1808 = vpop.trf.xlu0
      %v1809 = vpop.trf.xlu0
      %v1810 = vpop.trf.xlu0
      %v1811 = vpop.trf.xlu0
      %v1812 = vpop.trf.xlu0
      %v1813 = vpop.trf.xlu0
      %v1814 = vpop.trf.xlu0
      %v1815 = vpop.trf.xlu0
      %v1816 = vpop.trf.xlu0
      %v1817 = vpop.trf.xlu0
      %v1818 = vpop.trf.xlu0
      %v1819 = vpop.trf.xlu0
      %1820 = vxpose.xlu0.b32.start [1/16] %v1716, 128
      %1821 = vxpose.xlu0.b32.cont [2/16] 0.0, 128
      %1822 = vxpose.xlu0.b32.cont [3/16] 0.0, 128
      %1823 = vxpose.xlu0.b32.cont [4/16] 0.0, 128
      %1824 = vxpose.xlu0.b32.cont [5/16] 0.0, 128
      %1825 = vxpose.xlu0.b32.cont [6/16] 0.0, 128
      %1826 = vxpose.xlu0.b32.cont [7/16] 0.0, 128
      %1827 = vxpose.xlu0.b32.cont [8/16] 0.0, 128
      %1828 = vxpose.xlu0.b32.cont [9/16] 0.0, 128
      %1829 = vxpose.xlu0.b32.cont [10/16] 0.0, 128
      %1830 = vxpose.xlu0.b32.cont [11/16] 0.0, 128
      %1831 = vxpose.xlu0.b32.cont [12/16] 0.0, 128
      %1832 = vxpose.xlu0.b32.cont [13/16] 0.0, 128
      %1833 = vxpose.xlu0.b32.cont [14/16] 0.0, 128
      %1834 = vxpose.xlu0.b32.cont [15/16] 0.0, 128
      %1835 = vxpose.xlu0.b32.end [16/16] 0.0, 128
      %v1836 = vpop.trf.xlu0
      %v1837 = vpop.trf.xlu0
      %v1838 = vpop.trf.xlu0
      %v1839 = vpop.trf.xlu0
      %v1840 = vpop.trf.xlu0
      %v1841 = vpop.trf.xlu0
      %v1842 = vpop.trf.xlu0
      %v1843 = vpop.trf.xlu0
      %v1844 = vpop.trf.xlu0
      %v1845 = vpop.trf.xlu0
      %v1846 = vpop.trf.xlu0
      %v1847 = vpop.trf.xlu0
      %v1848 = vpop.trf.xlu0
      %v1849 = vpop.trf.xlu0
      %v1850 = vpop.trf.xlu0
      %v1851 = vpop.trf.xlu0
      %1852 = vxpose.xlu0.b32.start [1/16] %v1699, 128
      %1853 = vxpose.xlu0.b32.cont [2/16] 0.0, 128
      %1854 = vxpose.xlu0.b32.cont [3/16] 0.0, 128
      %1855 = vxpose.xlu0.b32.cont [4/16] 0.0, 128
      %1856 = vxpose.xlu0.b32.cont [5/16] 0.0, 128
      %1857 = vxpose.xlu0.b32.cont [6/16] 0.0, 128
      %1858 = vxpose.xlu0.b32.cont [7/16] 0.0, 128
      %1859 = vxpose.xlu0.b32.cont [8/16] 0.0, 128
      %1860 = vxpose.xlu0.b32.cont [9/16] 0.0, 128
      %1861 = vxpose.xlu0.b32.cont [10/16] 0.0, 128
      %1862 = vxpose.xlu0.b32.cont [11/16] 0.0, 128
      %1863 = vxpose.xlu0.b32.cont [12/16] 0.0, 128
      %1864 = vxpose.xlu0.b32.cont [13/16] 0.0, 128
      %1865 = vxpose.xlu0.b32.cont [14/16] 0.0, 128
      %1866 = vxpose.xlu0.b32.cont [15/16] 0.0, 128
      %1867 = vxpose.xlu0.b32.end [16/16] 0.0, 128
      %v1868 = vpop.trf.xlu0
      %v1869 = vpop.trf.xlu0
      %v1870 = vpop.trf.xlu0
      %v1871 = vpop.trf.xlu0
      %v1872 = vpop.trf.xlu0
      %v1873 = vpop.trf.xlu0
      %v1874 = vpop.trf.xlu0
      %v1875 = vpop.trf.xlu0
      %v1876 = vpop.trf.xlu0
      %v1877 = vpop.trf.xlu0
      %v1878 = vpop.trf.xlu0
      %v1879 = vpop.trf.xlu0
      %v1880 = vpop.trf.xlu0
      %v1881 = vpop.trf.xlu0
      %v1882 = vpop.trf.xlu0
      %v1883 = vpop.trf.xlu0
      %1884 = vxpose.xlu0.b32.start [1/16] %v1717, 128
      %1885 = vxpose.xlu0.b32.cont [2/16] 0.0, 128
      %1886 = vxpose.xlu0.b32.cont [3/16] 0.0, 128
      %1887 = vxpose.xlu0.b32.cont [4/16] 0.0, 128
      %1888 = vxpose.xlu0.b32.cont [5/16] 0.0, 128
      %1889 = vxpose.xlu0.b32.cont [6/16] 0.0, 128
      %1890 = vxpose.xlu0.b32.cont [7/16] 0.0, 128
      %1891 = vxpose.xlu0.b32.cont [8/16] 0.0, 128
      %1892 = vxpose.xlu0.b32.cont [9/16] 0.0, 128
      %1893 = vxpose.xlu0.b32.cont [10/16] 0.0, 128
      %1894 = vxpose.xlu0.b32.cont [11/16] 0.0, 128
      %1895 = vxpose.xlu0.b32.cont [12/16] 0.0, 128
      %1896 = vxpose.xlu0.b32.cont [13/16] 0.0, 128
      %1897 = vxpose.xlu0.b32.cont [14/16] 0.0, 128
      %1898 = vxpose.xlu0.b32.cont [15/16] 0.0, 128
      %1899 = vxpose.xlu0.b32.end [16/16] 0.0, 128
      %v1900 = vpop.trf.xlu0
      %v1901 = vpop.trf.xlu0
      %v1902 = vpop.trf.xlu0
      %v1903 = vpop.trf.xlu0
      %v1904 = vpop.trf.xlu0
      %v1905 = vpop.trf.xlu0
      %v1906 = vpop.trf.xlu0
      %v1907 = vpop.trf.xlu0
      %v1908 = vpop.trf.xlu0
      %v1909 = vpop.trf.xlu0
      %v1910 = vpop.trf.xlu0
      %v1911 = vpop.trf.xlu0
      %v1912 = vpop.trf.xlu0
      %v1913 = vpop.trf.xlu0
      %v1914 = vpop.trf.xlu0
      %v1915 = vpop.trf.xlu0
      %1916 = vxpose.xlu0.b32.start [1/16] %v1708, 128
      %1917 = vxpose.xlu0.b32.cont [2/16] 0.0, 128
      %1918 = vxpose.xlu0.b32.cont [3/16] 0.0, 128
      %1919 = vxpose.xlu0.b32.cont [4/16] 0.0, 128
      %1920 = vxpose.xlu0.b32.cont [5/16] 0.0, 128
      %1921 = vxpose.xlu0.b32.cont [6/16] 0.0, 128
      %1922 = vxpose.xlu0.b32.cont [7/16] 0.0, 128
      %1923 = vxpose.xlu0.b32.cont [8/16] 0.0, 128
      %1924 = vxpose.xlu0.b32.cont [9/16] 0.0, 128
      %1925 = vxpose.xlu0.b32.cont [10/16] 0.0, 128
      %1926 = vxpose.xlu0.b32.cont [11/16] 0.0, 128
      %1927 = vxpose.xlu0.b32.cont [12/16] 0.0, 128
      %1928 = vxpose.xlu0.b32.cont [13/16] 0.0, 128
      %1929 = vxpose.xlu0.b32.cont [14/16] 0.0, 128
      %1930 = vxpose.xlu0.b32.cont [15/16] 0.0, 128
      %1931 = vxpose.xlu0.b32.end [16/16] 0.0, 128
      %v1932 = vpop.trf.xlu0
      %v1933 = vpop.trf.xlu0
      %v1934 = vpop.trf.xlu0
      %v1935 = vpop.trf.xlu0
      %v1936 = vpop.trf.xlu0
      %v1937 = vpop.trf.xlu0
      %v1938 = vpop.trf.xlu0
      %v1939 = vpop.trf.xlu0
      %v1940 = vpop.trf.xlu0
      %v1941 = vpop.trf.xlu0
      %v1942 = vpop.trf.xlu0
      %v1943 = vpop.trf.xlu0
      %v1944 = vpop.trf.xlu0
      %v1945 = vpop.trf.xlu0
      %v1946 = vpop.trf.xlu0
      %v1947 = vpop.trf.xlu0
      %1948 = vxpose.xlu0.b32.start [1/16] %v1718, 128
      %1949 = vxpose.xlu0.b32.cont [2/16] 0.0, 128
      %1950 = vxpose.xlu0.b32.cont [3/16] 0.0, 128
      %1951 = vxpose.xlu0.b32.cont [4/16] 0.0, 128
      %1952 = vxpose.xlu0.b32.cont [5/16] 0.0, 128
      %1953 = vxpose.xlu0.b32.cont [6/16] 0.0, 128
      %1954 = vxpose.xlu0.b32.cont [7/16] 0.0, 128
      %1955 = vxpose.xlu0.b32.cont [8/16] 0.0, 128
      %1956 = vxpose.xlu0.b32.cont [9/16] 0.0, 128
      %1957 = vxpose.xlu0.b32.cont [10/16] 0.0, 128
      %1958 = vxpose.xlu0.b32.cont [11/16] 0.0, 128
      %1959 = vxpose.xlu0.b32.cont [12/16] 0.0, 128
      %1960 = vxpose.xlu0.b32.cont [13/16] 0.0, 128
      %1961 = vxpose.xlu0.b32.cont [14/16] 0.0, 128
      %1962 = vxpose.xlu0.b32.cont [15/16] 0.0, 128
      %1963 = vxpose.xlu0.b32.end [16/16] 0.0, 128
      %v1964 = vpop.trf.xlu0
      %v1965 = vpop.trf.xlu0
      %v1966 = vpop.trf.xlu0
      %v1967 = vpop.trf.xlu0
      %v1968 = vpop.trf.xlu0
      %v1969 = vpop.trf.xlu0
      %v1970 = vpop.trf.xlu0
      %v1971 = vpop.trf.xlu0
      %v1972 = vpop.trf.xlu0
      %v1973 = vpop.trf.xlu0
      %v1974 = vpop.trf.xlu0
      %v1975 = vpop.trf.xlu0
      %v1976 = vpop.trf.xlu0
      %v1977 = vpop.trf.xlu0
      %v1978 = vpop.trf.xlu0
      %v1979 = vpop.trf.xlu0
      %1980 = vxpose.xlu0.b32.start [1/16] %v1715, 128
      %1981 = vxpose.xlu0.b32.cont [2/16] 0.0, 128
      %1982 = vxpose.xlu0.b32.cont [3/16] 0.0, 128
      %1983 = vxpose.xlu0.b32.cont [4/16] 0.0, 128
      %1984 = vxpose.xlu0.b32.cont [5/16] 0.0, 128
      %1985 = vxpose.xlu0.b32.cont [6/16] 0.0, 128
      %1986 = vxpose.xlu0.b32.cont [7/16] 0.0, 128
      %1987 = vxpose.xlu0.b32.cont [8/16] 0.0, 128
      %1988 = vxpose.xlu0.b32.cont [9/16] 0.0, 128
      %1989 = vxpose.xlu0.b32.cont [10/16] 0.0, 128
      %1990 = vxpose.xlu0.b32.cont [11/16] 0.0, 128
      %1991 = vxpose.xlu0.b32.cont [12/16] 0.0, 128
      %1992 = vxpose.xlu0.b32.cont [13/16] 0.0, 128
      %1993 = vxpose.xlu0.b32.cont [14/16] 0.0, 128
      %1994 = vxpose.xlu0.b32.cont [15/16] 0.0, 128
      %1995 = vxpose.xlu0.b32.end [16/16] 0.0, 128
      %v1996 = vpop.trf.xlu0
      %v1997 = vpop.trf.xlu0
      %v1998 = vpop.trf.xlu0
      %v1999 = vpop.trf.xlu0
      %v2000 = vpop.trf.xlu0
      %v2001 = vpop.trf.xlu0
      %v2002 = vpop.trf.xlu0
      %v2003 = vpop.trf.xlu0
      %v2004 = vpop.trf.xlu0
      %v2005 = vpop.trf.xlu0
      %v2006 = vpop.trf.xlu0
      %v2007 = vpop.trf.xlu0
      %v2008 = vpop.trf.xlu0
      %v2009 = vpop.trf.xlu0
      %v2010 = vpop.trf.xlu0
      %v2011 = vpop.trf.xlu0
      %2012 = vxpose.xlu0.b32.start [1/16] %v1719, 128
      %2013 = vxpose.xlu0.b32.cont [2/16] 0.0, 128
      %2014 = vxpose.xlu0.b32.cont [3/16] 0.0, 128
      %2015 = vxpose.xlu0.b32.cont [4/16] 0.0, 128
      %2016 = vxpose.xlu0.b32.cont [5/16] 0.0, 128
      %2017 = vxpose.xlu0.b32.cont [6/16] 0.0, 128
      %2018 = vxpose.xlu0.b32.cont [7/16] 0.0, 128
      %2019 = vxpose.xlu0.b32.cont [8/16] 0.0, 128
      %2020 = vxpose.xlu0.b32.cont [9/16] 0.0, 128
      %2021 = vxpose.xlu0.b32.cont [10/16] 0.0, 128
      %2022 = vxpose.xlu0.b32.cont [11/16] 0.0, 128
      %2023 = vxpose.xlu0.b32.cont [12/16] 0.0, 128
      %2024 = vxpose.xlu0.b32.cont [13/16] 0.0, 128
      %2025 = vxpose.xlu0.b32.cont [14/16] 0.0, 128
      %2026 = vxpose.xlu0.b32.cont [15/16] 0.0, 128
      %2027 = vxpose.xlu0.b32.end [16/16] 0.0, 128
      %v2028 = vpop.trf.xlu0
      %v2029 = vpop.trf.xlu0
      %v2030 = vpop.trf.xlu0
      %v2031 = vpop.trf.xlu0
      %v2032 = vpop.trf.xlu0
      %v2033 = vpop.trf.xlu0
      %v2034 = vpop.trf.xlu0
      %v2035 = vpop.trf.xlu0
      %v2036 = vpop.trf.xlu0
      %v2037 = vpop.trf.xlu0
      %v2038 = vpop.trf.xlu0
      %v2039 = vpop.trf.xlu0
      %v2040 = vpop.trf.xlu0
      %v2041 = vpop.trf.xlu0
      %v2042 = vpop.trf.xlu0
      %v2043 = vpop.trf.xlu0
      %2044 = vxpose.xlu0.b32.start [1/16] %v1760, 128
      %2045 = vxpose.xlu0.b32.cont [2/16] 0.0, 128
      %2046 = vxpose.xlu0.b32.cont [3/16] 0.0, 128
      %2047 = vxpose.xlu0.b32.cont [4/16] 0.0, 128
      %2048 = vxpose.xlu0.b32.cont [5/16] 0.0, 128
      %2049 = vxpose.xlu0.b32.cont [6/16] 0.0, 128
      %2050 = vxpose.xlu0.b32.cont [7/16] 0.0, 128
      %2051 = vxpose.xlu0.b32.cont [8/16] 0.0, 128
      %2052 = vxpose.xlu0.b32.cont [9/16] 0.0, 128
      %2053 = vxpose.xlu0.b32.cont [10/16] 0.0, 128
      %2054 = vxpose.xlu0.b32.cont [11/16] 0.0, 128
      %2055 = vxpose.xlu0.b32.cont [12/16] 0.0, 128
      %2056 = vxpose.xlu0.b32.cont [13/16] 0.0, 128
      %2057 = vxpose.xlu0.b32.cont [14/16] 0.0, 128
      %2058 = vxpose.xlu0.b32.cont [15/16] 0.0, 128
      %2059 = vxpose.xlu0.b32.end [16/16] 0.0, 128
      %v2060 = vpop.trf.xlu0
      %v2061 = vpop.trf.xlu0
      %v2062 = vpop.trf.xlu0
      %v2063 = vpop.trf.xlu0
      %v2064 = vpop.trf.xlu0
      %v2065 = vpop.trf.xlu0
      %v2066 = vpop.trf.xlu0
      %v2067 = vpop.trf.xlu0
      %v2068 = vpop.trf.xlu0
      %v2069 = vpop.trf.xlu0
      %v2070 = vpop.trf.xlu0
      %v2071 = vpop.trf.xlu0
      %v2072 = vpop.trf.xlu0
      %v2073 = vpop.trf.xlu0
      %v2074 = vpop.trf.xlu0
      %v2075 = vpop.trf.xlu0
      %2076 = vxpose.xlu0.b32.start [1/16] %v1784, 128
      %2077 = vxpose.xlu0.b32.cont [2/16] 0.0, 128
      %2078 = vxpose.xlu0.b32.cont [3/16] 0.0, 128
      %2079 = vxpose.xlu0.b32.cont [4/16] 0.0, 128
      %2080 = vxpose.xlu0.b32.cont [5/16] 0.0, 128
      %2081 = vxpose.xlu0.b32.cont [6/16] 0.0, 128
      %2082 = vxpose.xlu0.b32.cont [7/16] 0.0, 128
      %2083 = vxpose.xlu0.b32.cont [8/16] 0.0, 128
      %2084 = vxpose.xlu0.b32.cont [9/16] 0.0, 128
      %2085 = vxpose.xlu0.b32.cont [10/16] 0.0, 128
      %2086 = vxpose.xlu0.b32.cont [11/16] 0.0, 128
      %2087 = vxpose.xlu0.b32.cont [12/16] 0.0, 128
      %2088 = vxpose.xlu0.b32.cont [13/16] 0.0, 128
      %2089 = vxpose.xlu0.b32.cont [14/16] 0.0, 128
      %2090 = vxpose.xlu0.b32.cont [15/16] 0.0, 128
      %2091 = vxpose.xlu0.b32.end [16/16] 0.0, 128
      %v2092 = vpop.trf.xlu0
      %v2093 = vpop.trf.xlu0
      %v2094 = vpop.trf.xlu0
      %v2095 = vpop.trf.xlu0
      %v2096 = vpop.trf.xlu0
      %v2097 = vpop.trf.xlu0
      %v2098 = vpop.trf.xlu0
      %v2099 = vpop.trf.xlu0
      %v2100 = vpop.trf.xlu0
      %v2101 = vpop.trf.xlu0
      %v2102 = vpop.trf.xlu0
      %v2103 = vpop.trf.xlu0
      %v2104 = vpop.trf.xlu0
      %v2105 = vpop.trf.xlu0
      %v2106 = vpop.trf.xlu0
      %v2107 = vpop.trf.xlu0
      %2108 = vxpose.xlu0.b32.start [1/16] %v1767, 128
      %2109 = vxpose.xlu0.b32.cont [2/16] 0.0, 128
      %2110 = vxpose.xlu0.b32.cont [3/16] 0.0, 128
      %2111 = vxpose.xlu0.b32.cont [4/16] 0.0, 128
      %2112 = vxpose.xlu0.b32.cont [5/16] 0.0, 128
      %2113 = vxpose.xlu0.b32.cont [6/16] 0.0, 128
      %2114 = vxpose.xlu0.b32.cont [7/16] 0.0, 128
      %2115 = vxpose.xlu0.b32.cont [8/16] 0.0, 128
      %2116 = vxpose.xlu0.b32.cont [9/16] 0.0, 128
      %2117 = vxpose.xlu0.b32.cont [10/16] 0.0, 128
      %2118 = vxpose.xlu0.b32.cont [11/16] 0.0, 128
      %2119 = vxpose.xlu0.b32.cont [12/16] 0.0, 128
      %2120 = vxpose.xlu0.b32.cont [13/16] 0.0, 128
      %2121 = vxpose.xlu0.b32.cont [14/16] 0.0, 128
      %2122 = vxpose.xlu0.b32.cont [15/16] 0.0, 128
      %2123 = vxpose.xlu0.b32.end [16/16] 0.0, 128
      %v2124 = vpop.trf.xlu0
      %v2125 = vpop.trf.xlu0
      %v2126 = vpop.trf.xlu0
      %v2127 = vpop.trf.xlu0
      %v2128 = vpop.trf.xlu0
      %v2129 = vpop.trf.xlu0
      %v2130 = vpop.trf.xlu0
      %v2131 = vpop.trf.xlu0
      %v2132 = vpop.trf.xlu0
      %v2133 = vpop.trf.xlu0
      %v2134 = vpop.trf.xlu0
      %v2135 = vpop.trf.xlu0
      %v2136 = vpop.trf.xlu0
      %v2137 = vpop.trf.xlu0
      %v2138 = vpop.trf.xlu0
      %v2139 = vpop.trf.xlu0
      %2140 = vxpose.xlu0.b32.start [1/16] %v1785, 128
      %2141 = vxpose.xlu0.b32.cont [2/16] 0.0, 128
      %2142 = vxpose.xlu0.b32.cont [3/16] 0.0, 128
      %2143 = vxpose.xlu0.b32.cont [4/16] 0.0, 128
      %2144 = vxpose.xlu0.b32.cont [5/16] 0.0, 128
      %2145 = vxpose.xlu0.b32.cont [6/16] 0.0, 128
      %2146 = vxpose.xlu0.b32.cont [7/16] 0.0, 128
      %2147 = vxpose.xlu0.b32.cont [8/16] 0.0, 128
      %2148 = vxpose.xlu0.b32.cont [9/16] 0.0, 128
      %2149 = vxpose.xlu0.b32.cont [10/16] 0.0, 128
      %2150 = vxpose.xlu0.b32.cont [11/16] 0.0, 128
      %2151 = vxpose.xlu0.b32.cont [12/16] 0.0, 128
      %2152 = vxpose.xlu0.b32.cont [13/16] 0.0, 128
      %2153 = vxpose.xlu0.b32.cont [14/16] 0.0, 128
      %2154 = vxpose.xlu0.b32.cont [15/16] 0.0, 128
      %2155 = vxpose.xlu0.b32.end [16/16] 0.0, 128
      %v2156 = vpop.trf.xlu0
      %v2157 = vpop.trf.xlu0
      %v2158 = vpop.trf.xlu0
      %v2159 = vpop.trf.xlu0
      %v2160 = vpop.trf.xlu0
      %v2161 = vpop.trf.xlu0
      %v2162 = vpop.trf.xlu0
      %v2163 = vpop.trf.xlu0
      %v2164 = vpop.trf.xlu0
      %v2165 = vpop.trf.xlu0
      %v2166 = vpop.trf.xlu0
      %v2167 = vpop.trf.xlu0
      %v2168 = vpop.trf.xlu0
      %v2169 = vpop.trf.xlu0
      %v2170 = vpop.trf.xlu0
      %v2171 = vpop.trf.xlu0
      %2172 = vxpose.xlu0.b32.start [1/16] %v1776, 128
      %2173 = vxpose.xlu0.b32.cont [2/16] 0.0, 128
      %2174 = vxpose.xlu0.b32.cont [3/16] 0.0, 128
      %2175 = vxpose.xlu0.b32.cont [4/16] 0.0, 128
      %2176 = vxpose.xlu0.b32.cont [5/16] 0.0, 128
      %2177 = vxpose.xlu0.b32.cont [6/16] 0.0, 128
      %2178 = vxpose.xlu0.b32.cont [7/16] 0.0, 128
      %2179 = vxpose.xlu0.b32.cont [8/16] 0.0, 128
      %2180 = vxpose.xlu0.b32.cont [9/16] 0.0, 128
      %2181 = vxpose.xlu0.b32.cont [10/16] 0.0, 128
      %2182 = vxpose.xlu0.b32.cont [11/16] 0.0, 128
      %2183 = vxpose.xlu0.b32.cont [12/16] 0.0, 128
      %2184 = vxpose.xlu0.b32.cont [13/16] 0.0, 128
      %2185 = vxpose.xlu0.b32.cont [14/16] 0.0, 128
      %2186 = vxpose.xlu0.b32.cont [15/16] 0.0, 128
      %2187 = vxpose.xlu0.b32.end [16/16] 0.0, 128
      %v2188 = vpop.trf.xlu0
      %v2189 = vpop.trf.xlu0
      %v2190 = vpop.trf.xlu0
      %v2191 = vpop.trf.xlu0
      %v2192 = vpop.trf.xlu0
      %v2193 = vpop.trf.xlu0
      %v2194 = vpop.trf.xlu0
      %v2195 = vpop.trf.xlu0
      %v2196 = vpop.trf.xlu0
      %v2197 = vpop.trf.xlu0
      %v2198 = vpop.trf.xlu0
      %v2199 = vpop.trf.xlu0
      %v2200 = vpop.trf.xlu0
      %v2201 = vpop.trf.xlu0
      %v2202 = vpop.trf.xlu0
      %v2203 = vpop.trf.xlu0
      %2204 = vxpose.xlu0.b32.start [1/16] %v1786, 128
      %2205 = vxpose.xlu0.b32.cont [2/16] 0.0, 128
      %2206 = vxpose.xlu0.b32.cont [3/16] 0.0, 128
      %2207 = vxpose.xlu0.b32.cont [4/16] 0.0, 128
      %2208 = vxpose.xlu0.b32.cont [5/16] 0.0, 128
      %2209 = vxpose.xlu0.b32.cont [6/16] 0.0, 128
      %2210 = vxpose.xlu0.b32.cont [7/16] 0.0, 128
      %2211 = vxpose.xlu0.b32.cont [8/16] 0.0, 128
      %2212 = vxpose.xlu0.b32.cont [9/16] 0.0, 128
      %2213 = vxpose.xlu0.b32.cont [10/16] 0.0, 128
      %2214 = vxpose.xlu0.b32.cont [11/16] 0.0, 128
      %2215 = vxpose.xlu0.b32.cont [12/16] 0.0, 128
      %2216 = vxpose.xlu0.b32.cont [13/16] 0.0, 128
      %2217 = vxpose.xlu0.b32.cont [14/16] 0.0, 128
      %2218 = vxpose.xlu0.b32.cont [15/16] 0.0, 128
      %2219 = vxpose.xlu0.b32.end [16/16] 0.0, 128
      %v2220 = vpop.trf.xlu0
      %v2221 = vpop.trf.xlu0
      %v2222 = vpop.trf.xlu0
      %v2223 = vpop.trf.xlu0
      %v2224 = vpop.trf.xlu0
      %v2225 = vpop.trf.xlu0
      %v2226 = vpop.trf.xlu0
      %v2227 = vpop.trf.xlu0
      %v2228 = vpop.trf.xlu0
      %v2229 = vpop.trf.xlu0
      %v2230 = vpop.trf.xlu0
      %v2231 = vpop.trf.xlu0
      %v2232 = vpop.trf.xlu0
      %v2233 = vpop.trf.xlu0
      %v2234 = vpop.trf.xlu0
      %v2235 = vpop.trf.xlu0
      %2236 = vxpose.xlu0.b32.start [1/16] %v1783, 128
      %2237 = vxpose.xlu0.b32.cont [2/16] 0.0, 128
      %2238 = vxpose.xlu0.b32.cont [3/16] 0.0, 128
      %2239 = vxpose.xlu0.b32.cont [4/16] 0.0, 128
      %2240 = vxpose.xlu0.b32.cont [5/16] 0.0, 128
      %2241 = vxpose.xlu0.b32.cont [6/16] 0.0, 128
      %2242 = vxpose.xlu0.b32.cont [7/16] 0.0, 128
      %2243 = vxpose.xlu0.b32.cont [8/16] 0.0, 128
      %2244 = vxpose.xlu0.b32.cont [9/16] 0.0, 128
      %2245 = vxpose.xlu0.b32.cont [10/16] 0.0, 128
      %2246 = vxpose.xlu0.b32.cont [11/16] 0.0, 128
      %2247 = vxpose.xlu0.b32.cont [12/16] 0.0, 128
      %2248 = vxpose.xlu0.b32.cont [13/16] 0.0, 128
      %2249 = vxpose.xlu0.b32.cont [14/16] 0.0, 128
      %2250 = vxpose.xlu0.b32.cont [15/16] 0.0, 128
      %2251 = vxpose.xlu0.b32.end [16/16] 0.0, 128
      %v2252 = vpop.trf.xlu0
      %v2253 = vpop.trf.xlu0
      %v2254 = vpop.trf.xlu0
      %v2255 = vpop.trf.xlu0
      %v2256 = vpop.trf.xlu0
      %v2257 = vpop.trf.xlu0
      %v2258 = vpop.trf.xlu0
      %v2259 = vpop.trf.xlu0
      %v2260 = vpop.trf.xlu0
      %v2261 = vpop.trf.xlu0
      %v2262 = vpop.trf.xlu0
      %v2263 = vpop.trf.xlu0
      %v2264 = vpop.trf.xlu0
      %v2265 = vpop.trf.xlu0
      %v2266 = vpop.trf.xlu0
      %v2267 = vpop.trf.xlu0
      %2268 = vxpose.xlu0.b32.start [1/16] %v1787, 128
      %2269 = vxpose.xlu0.b32.cont [2/16] 0.0, 128
      %2270 = vxpose.xlu0.b32.cont [3/16] 0.0, 128
      %2271 = vxpose.xlu0.b32.cont [4/16] 0.0, 128
      %2272 = vxpose.xlu0.b32.cont [5/16] 0.0, 128
      %2273 = vxpose.xlu0.b32.cont [6/16] 0.0, 128
      %2274 = vxpose.xlu0.b32.cont [7/16] 0.0, 128
      %2275 = vxpose.xlu0.b32.cont [8/16] 0.0, 128
      %2276 = vxpose.xlu0.b32.cont [9/16] 0.0, 128
      %2277 = vxpose.xlu0.b32.cont [10/16] 0.0, 128
      %2278 = vxpose.xlu0.b32.cont [11/16] 0.0, 128
      %2279 = vxpose.xlu0.b32.cont [12/16] 0.0, 128
      %2280 = vxpose.xlu0.b32.cont [13/16] 0.0, 128
      %2281 = vxpose.xlu0.b32.cont [14/16] 0.0, 128
      %2282 = vxpose.xlu0.b32.cont [15/16] 0.0, 128
      %2283 = vxpose.xlu0.b32.end [16/16] 0.0, 128
      %v2284 = vpop.trf.xlu0
      %v2285 = vpop.trf.xlu0
      %v2286 = vpop.trf.xlu0
      %v2287 = vpop.trf.xlu0
      %v2288 = vpop.trf.xlu0
      %v2289 = vpop.trf.xlu0
      %v2290 = vpop.trf.xlu0
      %v2291 = vpop.trf.xlu0
      %v2292 = vpop.trf.xlu0
      %v2293 = vpop.trf.xlu0
      %v2294 = vpop.trf.xlu0
      %v2295 = vpop.trf.xlu0
      %v2296 = vpop.trf.xlu0
      %v2297 = vpop.trf.xlu0
      %v2298 = vpop.trf.xlu0
      %v2299 = vpop.trf.xlu0
      %2300 = vst.msk [vmem:[%s197] sm:$0xff] %vm868, %v1804
      %2301 = vst.msk [vmem:[%s197 + $0x8] sm:$0xff] %vm868, %v1836
      %2302 = vst.msk [vmem:[%s197 + $0x10] sm:$0xff] %vm868, %v1868
      %2303 = vst.msk [vmem:[%s197 + $0x18] sm:$0xff] %vm868, %v1900
      %2304 = vst.msk [vmem:[%s197 + $0x20] sm:$0xff] %vm868, %v1932
      %2305 = vst.msk [vmem:[%s197 + $0x28] sm:$0xff] %vm868, %v1964
      %2306 = vst.msk [vmem:[%s197 + $0x30] sm:$0xff] %vm868, %v1996
      %2307 = vst.msk [vmem:[%s197 + $0x38] sm:$0xff] %vm868, %v2028
      %2308 = vst.msk [vmem:[%s197 + $0x40] sm:$0xff] %vm868, %v2060
      %2309 = vst.msk [vmem:[%s197 + $0x48] sm:$0xff] %vm868, %v2092
      %2310 = vst.msk [vmem:[%s197 + $0x50] sm:$0xff] %vm868, %v2124
      %2311 = vst.msk [vmem:[%s197 + $0x58] sm:$0xff] %vm868, %v2156
      %2312 = vst.msk [vmem:[%s197 + $0x60] sm:$0xff] %vm868, %v2188
      %2313 = vst.msk [vmem:[%s197 + $0x68] sm:$0xff] %vm868, %v2220
      %2314 = vst.msk [vmem:[%s197 + $0x70] sm:$0xff] %vm868, %v2252
      %2315 = vst.msk [vmem:[%s197 + $0x78] sm:$0xff] %vm868, %v2284
      %p2316 = scmp.lt.s32.totalorder %s15, 1
      %s2317 = scalar_select %p2316, %s15, 1
      %s2318 = smul.addr %s2317, 16
      %s2319 = smul.addr %s2318, 8
      %s2320 = scalar_lea.vmem %s4, %s2319
      // Predicated region
      $region37: #{tpu_custom_call.1} parent=35 // pred_check
        %p2321 = pneg %p122
      $region38: #{tpu_custom_call.1} parent=35 // pred_check_branch
        %2323 = sbr.rel (%p2321) target = $region40
      $region39: #{tpu_custom_call.1} parent=35 // pred_region
        _
      $region40: #{tpu_custom_call.1} parent=35 // pred_fallthru
        _
    $region36: #{tpu_custom_call.1} parent=5 // pred_fallthru
      _
    %p2324 = scmp.le.s32.totalorder 2, %s10
    // Predicated region
    $region41: #{tpu_custom_call.1} parent=5 // pred_check
      %p2325 = pneg %p2324
    $region42: #{tpu_custom_call.1} parent=5 // pred_check_branch
      %2327 = sbr.rel (%p2325) target = $region44
    $region43: #{tpu_custom_call.1} parent=5 // pred_region
      %s2328 = ssub.s32 %s10, 2
      // Predicated region
      $region45: #{tpu_custom_call.1} parent=43 // pred_check
        %p2329 = pneg %p128
      $region46: #{tpu_custom_call.1} parent=43 // pred_check_branch
        %2331 = sbr.rel (%p2329) target = $region48
      $region47: #{tpu_custom_call.1} parent=43 // pred_region
        %p2332 = scmp.lt.s32.totalorder %s16, 1
        %s2333 = scalar_select %p2332, %s16, 1
        %s2334 = smul.addr %s2333, 16
        %s2335 = smul.addr %s2334, 8
        %s2336 = scalar_lea.vmem %s4, %s2335
      $region48: #{tpu_custom_call.1} parent=43 // pred_fallthru
        _
    $region44: #{tpu_custom_call.1} parent=5 // pred_fallthru
      _
  $region6: #{tpu_custom_call.1} parent=0 // loop_footer
    %s14 = sadd.s32 1, %s10
  $region7: #{tpu_custom_call.1} parent=0 // loop_footer_branch
    %9 = sbr.rel target = $region3
  $region8: #{tpu_custom_call.1} parent=0 // loop_exit
    _

</llo_original>
